<compile_context>
chip_gen: v6e
topology: v6e:2x2x1
jax: 0.10.0
libtpu: 0.0.40
codegen_flags: <defaults>
</compile_context>

<pallas_src>
import functools

import jax
import jax.numpy as jnp
from jax.experimental import pallas as pl
from jax.experimental.pallas import tpu as pltpu


# ----------------------------------------------------------------------------
# Row-tiled matmul + bias kernel (used for the hoisted input projection and
# the final fc layer).
# ----------------------------------------------------------------------------
def _matmul_bias_kernel(x_ref, w_ref, b_ref, o_ref):
    o_ref[...] = (
        jnp.dot(x_ref[...], w_ref[...], preferred_element_type=jnp.float32)
        + b_ref[...]
    ).astype(o_ref.dtype)


def matmul_bias(x2d, w, b):
    """x2d: (M, K); w: (K, N); b: (1, N) -> (M, N) float32."""
    M, K = x2d.shape
    N = w.shape[-1]
    tile_m = M
    for cand in (512, 256, 128, 64, 32, 16, 8):
        if M % cand == 0:
            tile_m = cand
            break
    return pl.pallas_call(
        _matmul_bias_kernel,
        out_shape=jax.ShapeDtypeStruct((M, N), jnp.float32),
        grid_spec=pltpu.PrefetchScalarGridSpec(
            num_scalar_prefetch=0,
            grid=(M // tile_m,),
            in_specs=[
                pl.BlockSpec((tile_m, K), lambda i: (i, 0)),
                pl.BlockSpec((K, N), lambda i: (0, 0)),   # grid-invariant
                pl.BlockSpec((1, N), lambda i: (0, 0)),   # grid-invariant
            ],
            out_specs=pl.BlockSpec((tile_m, N), lambda i: (i, 0)),
        ),
        compiler_params=pltpu.CompilerParams(
            dimension_semantics=("parallel",)),
    )(x2d, w, b)


# ----------------------------------------------------------------------------
# GRU recurrence kernel: time-major, time-chunked.
#   xp_ref : (TS, B, 3H)  precomputed x@W_ih + folded biases for this chunk
#   whh_ref: (H, 3H)      fused hidden weights (columns ordered r, z, n)
#   bhn_ref: (1, H)       recurrent bias of the n gate (must stay inside r*(.))
#   out_ref: (TS, B, H)
#   h_ref  : (B, H)       VMEM scratch, persists across grid (time-chunk) steps
# ----------------------------------------------------------------------------
def _gru_recurrent_kernel(xp_ref, whh_ref, bhn_ref, out_ref, h_ref, *,
                          ts, hidden):
    @pl.when(pl.program_id(0) == 0)
    def _():
        h_ref[...] = jnp.zeros(h_ref.shape, h_ref.dtype)

    whh = whh_ref[...]          # (H, 3H) — loaded once per chunk
    bhn = bhn_ref[...]          # (1, H)

    def step(t, h):
        xp = xp_ref[t]          # (B, 3H) contiguous time-major slab
        g = jnp.dot(h, whh, preferred_element_type=jnp.float32)   # (B, 3H)
        r = jax.nn.sigmoid(xp[:, :hidden] + g[:, :hidden])
        z = jax.nn.sigmoid(xp[:, hidden:2 * hidden] + g[:, hidden:2 * hidden])
        n = jnp.tanh(xp[:, 2 * hidden:] + r * (g[:, 2 * hidden:] + bhn))
        h_new = (1.0 - z) * n + z * h
        out_ref[t] = h_new.astype(out_ref.dtype)
        return h_new

    h_final = jax.lax.fori_loop(0, ts, step, h_ref[...], unroll=True)
    h_ref[...] = h_final


def _pick_time_chunk(seq_len, max_chunk=16):
    ts = 1
    for cand in range(1, min(seq_len, max_chunk) + 1):
        if seq_len % cand == 0:
            ts = cand
    return ts


def gru_layer_time_major(x_tm, w_ih, w_hh, b_x, b_hn):
    """One GRU layer on a time-major input.

    x_tm: (S, B, D); w_ih: (D, 3H); w_hh: (H, 3H); b_x: (1, 3H); b_hn: (1, H)
    returns (S, B, H) float32.
    """
    S, B, D = x_tm.shape
    H = w_hh.shape[0]

    # 1) Hoisted input projection: one big pipelined MXU matmul.
    xp = matmul_bias(x_tm.reshape(S * B, D), w_ih, b_x)      # (S*B, 3H)
    xp = xp.reshape(S, B, 3 * H)

    # 2) Sequential recurrence over time chunks.
    ts = _pick_time_chunk(S)
    kernel = functools.partial(_gru_recurrent_kernel, ts=ts, hidden=H)
    return pl.pallas_call(
        kernel,
        out_shape=jax.ShapeDtypeStruct((S, B, H), jnp.float32),
        grid_spec=pltpu.PrefetchScalarGridSpec(
            num_scalar_prefetch=0,
            grid=(S // ts,),
            in_specs=[
                pl.BlockSpec((ts, B, 3 * H), lambda c: (c, 0, 0)),
                pl.BlockSpec((H, 3 * H), lambda c: (0, 0)),   # grid-invariant
                pl.BlockSpec((1, H), lambda c: (0, 0)),       # grid-invariant
            ],
            out_specs=pl.BlockSpec((ts, B, H), lambda c: (c, 0, 0)),
            scratch_shapes=[pltpu.VMEM((B, H), jnp.float32)],
        ),
        compiler_params=pltpu.CompilerParams(
            dimension_semantics=("arbitrary",)),   # recurrence -> sequential
    )(xp, w_hh, b_hn)


# ----------------------------------------------------------------------------
# Parameters (PyTorch-equivalent init: U(-1/sqrt(H), 1/sqrt(H)) everywhere),
# stored in the fused/folded layout the kernels consume:
#   w_ih: (D, 3H), w_hh: (H, 3H)   columns ordered (r, z, n)
#   b_x : (1, 3H) = [b_ir+b_hr, b_iz+b_hz, b_in]
#   b_hn: (1, H)
# ----------------------------------------------------------------------------
def init_params(key, input_size, num_layers, hidden_size, output_size):
    bound = 1.0 / float(hidden_size) ** 0.5
    layers = []
    d_in = input_size
    for _ in range(num_layers):
        key, k1, k2, k3, k4 = jax.random.split(key, 5)
        w_ih = jax.random.uniform(k1, (d_in, 3 * hidden_size),
                                  jnp.float32, -bound, bound)
        w_hh = jax.random.uniform(k2, (hidden_size, 3 * hidden_size),
                                  jnp.float32, -bound, bound)
        b_ih = jax.random.uniform(k3, (1, 3 * hidden_size),
                                  jnp.float32, -bound, bound)
        b_hh = jax.random.uniform(k4, (1, 3 * hidden_size),
                                  jnp.float32, -bound, bound)
        # Fold biases (exact identity): r/z gates get b_ih+b_hh, the n-gate
        # input part gets b_in; b_hn stays separate (inside r * (...)).
        b_x = b_ih.at[:, :2 * hidden_size].add(b_hh[:, :2 * hidden_size])
        b_hn = b_hh[:, 2 * hidden_size:]
        layers.append((w_ih, w_hh, b_x, b_hn))
        d_in = hidden_size
    key, k5, k6 = jax.random.split(key, 3)
    w_fc = jax.random.uniform(k5, (hidden_size, output_size),
                              jnp.float32, -bound, bound)
    b_fc = jax.random.uniform(k6, (1, output_size), jnp.float32, -bound, bound)
    return {"layers": layers, "w_fc": w_fc, "b_fc": b_fc}


@jax.jit
def gru_model_forward(x, params):
    """x: (B, S, input_size) -> (B, S, output_size)."""
    B, S, _ = x.shape
    y = jnp.transpose(x, (1, 0, 2))                 # time-major (S, B, D)
    for (w_ih, w_hh, b_x, b_hn) in params["layers"]:
        y = gru_layer_time_major(y, w_ih, w_hh, b_x, b_hn)
    H = y.shape[-1]
    out2d = matmul_bias(y.reshape(S * B, H), params["w_fc"], params["b_fc"])
    return out2d.reshape(S, B, -1).transpose(1, 0, 2)   # back to (B, S, O)


# ----------------------------------------------------------------------------
# Pure-JAX reference (same folded-parameter layout; matches PyTorch GRU math).
# ----------------------------------------------------------------------------
def gru_model_ref(x, params):
    y = x
    for (w_ih, w_hh, b_x, b_hn) in params["layers"]:
        B, S, _ = y.shape
        H = w_hh.shape[0]
        h = jnp.zeros((B, H), jnp.float32)
        outs = []
        for t in range(S):
            xp = y[:, t, :] @ w_ih + b_x
            g = h @ w_hh
            r = jax.nn.sigmoid(xp[:, :H] + g[:, :H])
            z = jax.nn.sigmoid(xp[:, H:2 * H] + g[:, H:2 * H])
            n = jnp.tanh(xp[:, 2 * H:] + r * (g[:, 2 * H:] + b_hn))
            h = (1.0 - z) * n + z * h
            outs.append(h)
        y = jnp.stack(outs, axis=1)
    return y @ params["w_fc"] + params["b_fc"]


if __name__ == "__main__":
    batch, seq = 2, 8
    input_size, num_layers, hidden_size, output_size = 16, 2, 32, 8

    key = jax.random.PRNGKey(0)
    key, pkey, xkey = jax.random.split(key, 3)
    params = init_params(pkey, input_size, num_layers, hidden_size, output_size)
    x = jax.random.normal(xkey, (batch, seq, input_size), jnp.float32)

    out = jax.block_until_ready(gru_model_forward(x, params))
    ref = gru_model_ref(x, params)

    assert out.shape == (batch, seq, output_size), out.shape
    max_err = float(jnp.max(jnp.abs(out - ref)))
    assert max_err < 1e-4, max_err

    print("KERNEL_OK")
</pallas_src>

<mosaic_0001>
module attributes {stable_mosaic.version = 11 : i64} {
  func.func @_matmul_bias_kernel(%arg0: i32, %arg1: memref<16x32xf32, #tpu.memory_space<vmem>>, %arg2: memref<32x96xf32, #tpu.memory_space<vmem>>, %arg3: memref<1x96xf32, #tpu.memory_space<vmem>>, %arg4: memref<16x96xf32, #tpu.memory_space<vmem>>) attributes {dimension_semantics = [#tpu.dimension_semantics<parallel>], iteration_bounds = array<i64: 1>, scalar_prefetch = 0 : i64, scratch_operands = 0 : i64, tpu.core_type = #tpu.core_type<tc>, window_params = [{transform_indices = @transform_0, window_bounds = array<i64: 16, 32>}, {pipeline_mode = #tpu.pipeline_mode<synchronous>, transform_indices = @transform_1, window_bounds = array<i64: 32, 96>}, {pipeline_mode = #tpu.pipeline_mode<synchronous>, transform_indices = @transform_2, window_bounds = array<i64: 1, 96>}, {transform_indices = @transform_3, window_bounds = array<i64: 16, 96>}]} {
    %c0 = arith.constant 0 : index
    %c0_0 = arith.constant 0 : index
    %0 = vector.load %arg1[%c0, %c0_0] : memref<16x32xf32, #tpu.memory_space<vmem>>, vector<16x32xf32>
    %c0_1 = arith.constant 0 : index
    %c0_2 = arith.constant 0 : index
    %1 = vector.load %arg2[%c0_1, %c0_2] : memref<32x96xf32, #tpu.memory_space<vmem>>, vector<32x96xf32>
    %cst = arith.constant dense<0.000000e+00> : vector<16x96xf32>
    %2 = tpu.matmul %0, %1, %cst {dimension_numbers = #tpu.dot_dimension_numbers<[1], [0], [0], [1], [0, 0, 1, 1], [], []>} : vector<16x32xf32>, vector<32x96xf32>, vector<16x96xf32> -> vector<16x96xf32>
    %c0_3 = arith.constant 0 : index
    %c0_4 = arith.constant 0 : index
    %3 = vector.load %arg3[%c0_3, %c0_4] : memref<1x96xf32, #tpu.memory_space<vmem>>, vector<1x96xf32>
    %4 = vector.broadcast %3 : vector<1x96xf32> to vector<16x96xf32>
    %5 = arith.addf %2, %4 : vector<16x96xf32>
    %c0_5 = arith.constant 0 : index
    %c0_6 = arith.constant 0 : index
    %6 = vector.load %arg4[%c0_5, %c0_6] : memref<16x96xf32, #tpu.memory_space<vmem>>, vector<16x96xf32>
    tpu.vector_store %arg4[%c0_5, %c0_6], %5 {strides = array<i32>} : memref<16x96xf32, #tpu.memory_space<vmem>>, vector<16x96xf32>,
    return
  }
  func.func @transform_0(%arg0: i32) -> (i32, i32) {
    %c0_i32 = arith.constant 0 : i32
    %c0_i32_0 = arith.constant 0 : i32
    return %arg0, %c0_i32 : i32, i32
  }
  func.func @transform_1(%arg0: i32) -> (i32, i32) {
    %c0_i32 = arith.constant 0 : i32
    %c0_i32_0 = arith.constant 0 : i32
    %c0_i32_1 = arith.constant 0 : i32
    return %c0_i32, %c0_i32_0 : i32, i32
  }
  func.func @transform_2(%arg0: i32) -> (i32, i32) {
    %c0_i32 = arith.constant 0 : i32
    %c0_i32_0 = arith.constant 0 : i32
    %c0_i32_1 = arith.constant 0 : i32
    return %c0_i32, %c0_i32_0 : i32, i32
  }
  func.func @transform_3(%arg0: i32) -> (i32, i32) {
    %c0_i32 = arith.constant 0 : i32
    %c0_i32_0 = arith.constant 0 : i32
    return %arg0, %c0_i32 : i32, i32
  }
}

module attributes {stable_mosaic.version = 11 : i64} {
  func.func @_matmul_bias_kernel(%arg0: i32, %arg1: memref<16x16xf32, #tpu.memory_space<vmem>>, %arg2: memref<16x96xf32, #tpu.memory_space<vmem>>, %arg3: memref<1x96xf32, #tpu.memory_space<vmem>>, %arg4: memref<16x96xf32, #tpu.memory_space<vmem>>) attributes {dimension_semantics = [#tpu.dimension_semantics<parallel>], iteration_bounds = array<i64: 1>, scalar_prefetch = 0 : i64, scratch_operands = 0 : i64, tpu.core_type = #tpu.core_type<tc>, window_params = [{transform_indices = @transform_0, window_bounds = array<i64: 16, 16>}, {pipeline_mode = #tpu.pipeline_mode<synchronous>, transform_indices = @transform_1, window_bounds = array<i64: 16, 96>}, {pipeline_mode = #tpu.pipeline_mode<synchronous>, transform_indices = @transform_2, window_bounds = array<i64: 1, 96>}, {transform_indices = @transform_3, window_bounds = array<i64: 16, 96>}]} {
    %c0 = arith.constant 0 : index
    %c0_0 = arith.constant 0 : index
    %0 = vector.load %arg1[%c0, %c0_0] : memref<16x16xf32, #tpu.memory_space<vmem>>, vector<16x16xf32>
    %c0_1 = arith.constant 0 : index
    %c0_2 = arith.constant 0 : index
    %1 = vector.load %arg2[%c0_1, %c0_2] : memref<16x96xf32, #tpu.memory_space<vmem>>, vector<16x96xf32>
    %cst = arith.constant dense<0.000000e+00> : vector<16x96xf32>
    %2 = tpu.matmul %0, %1, %cst {dimension_numbers = #tpu.dot_dimension_numbers<[1], [0], [0], [1], [0, 0, 1, 1], [], []>} : vector<16x16xf32>, vector<16x96xf32>, vector<16x96xf32> -> vector<16x96xf32>
    %c0_3 = arith.constant 0 : index
    %c0_4 = arith.constant 0 : index
    %3 = vector.load %arg3[%c0_3, %c0_4] : memref<1x96xf32, #tpu.memory_space<vmem>>, vector<1x96xf32>
    %4 = vector.broadcast %3 : vector<1x96xf32> to vector<16x96xf32>
    %5 = arith.addf %2, %4 : vector<16x96xf32>
    %c0_5 = arith.constant 0 : index
    %c0_6 = arith.constant 0 : index
    %6 = vector.load %arg4[%c0_5, %c0_6] : memref<16x96xf32, #tpu.memory_space<vmem>>, vector<16x96xf32>
    tpu.vector_store %arg4[%c0_5, %c0_6], %5 {strides = array<i32>} : memref<16x96xf32, #tpu.memory_space<vmem>>, vector<16x96xf32>,
    return
  }
  func.func @transform_0(%arg0: i32) -> (i32, i32) {
    %c0_i32 = arith.constant 0 : i32
    %c0_i32_0 = arith.constant 0 : i32
    return %arg0, %c0_i32 : i32, i32
  }
  func.func @transform_1(%arg0: i32) -> (i32, i32) {
    %c0_i32 = arith.constant 0 : i32
    %c0_i32_0 = arith.constant 0 : i32
    %c0_i32_1 = arith.constant 0 : i32
    return %c0_i32, %c0_i32_0 : i32, i32
  }
  func.func @transform_2(%arg0: i32) -> (i32, i32) {
    %c0_i32 = arith.constant 0 : i32
    %c0_i32_0 = arith.constant 0 : i32
    %c0_i32_1 = arith.constant 0 : i32
    return %c0_i32, %c0_i32_0 : i32, i32
  }
  func.func @transform_3(%arg0: i32) -> (i32, i32) {
    %c0_i32 = arith.constant 0 : i32
    %c0_i32_0 = arith.constant 0 : i32
    return %arg0, %c0_i32 : i32, i32
  }
}

module attributes {stable_mosaic.version = 11 : i64} {
  func.func @_gru_recurrent_kernel(%arg0: i32, %arg1: memref<8x2x96xf32, #tpu.memory_space<vmem>>, %arg2: memref<32x96xf32, #tpu.memory_space<vmem>>, %arg3: memref<1x32xf32, #tpu.memory_space<vmem>>, %arg4: memref<8x2x32xf32, #tpu.memory_space<vmem>>, %arg5: memref<2x32xf32, #tpu.memory_space<vmem>>) attributes {dimension_semantics = [#tpu.dimension_semantics<arbitrary>], iteration_bounds = array<i64: 1>, scalar_prefetch = 0 : i64, scratch_operands = 1 : i64, tpu.core_type = #tpu.core_type<tc>, window_params = [{transform_indices = @transform_0, window_bounds = array<i64: 8, 2, 96>}, {pipeline_mode = #tpu.pipeline_mode<synchronous>, transform_indices = @transform_1, window_bounds = array<i64: 32, 96>}, {pipeline_mode = #tpu.pipeline_mode<synchronous>, transform_indices = @transform_2, window_bounds = array<i64: 1, 32>}, {transform_indices = @transform_3, window_bounds = array<i64: 8, 2, 32>}]} {
    %c0_i32 = arith.constant 0 : i32
    %0 = arith.cmpi eq, %arg0, %c0_i32 : i32
    %1 = arith.extui %0 : i1 to i32
    %c0_i32_0 = arith.constant 0 : i32
    %2 = arith.cmpi ne, %1, %c0_i32_0 : i32
    scf.if %2 {
      %cst_72 = arith.constant 0.000000e+00 : f32
      %295 = vector.broadcast %cst_72 : f32 to vector<2x32xf32>
      %c0_73 = arith.constant 0 : index
      %c0_74 = arith.constant 0 : index
      %296 = vector.load %arg5[%c0_73, %c0_74] : memref<2x32xf32, #tpu.memory_space<vmem>>, vector<2x32xf32>
      tpu.vector_store %arg5[%c0_73, %c0_74], %295 {strides = array<i32>} : memref<2x32xf32, #tpu.memory_space<vmem>>, vector<2x32xf32>,
    } else {
    }
    %c0 = arith.constant 0 : index
    %c0_1 = arith.constant 0 : index
    %3 = vector.load %arg2[%c0, %c0_1] : memref<32x96xf32, #tpu.memory_space<vmem>>, vector<32x96xf32>
    %c0_2 = arith.constant 0 : index
    %c0_3 = arith.constant 0 : index
    %4 = vector.load %arg3[%c0_2, %c0_3] : memref<1x32xf32, #tpu.memory_space<vmem>>, vector<1x32xf32>
    %c0_4 = arith.constant 0 : index
    %c0_5 = arith.constant 0 : index
    %5 = vector.load %arg5[%c0_4, %c0_5] : memref<2x32xf32, #tpu.memory_space<vmem>>, vector<2x32xf32>
    %c0_i32_6 = arith.constant 0 : i32
    %6 = arith.index_cast %c0_i32_6 : i32 to index
    %c0_7 = arith.constant 0 : index
    %c0_8 = arith.constant 0 : index
    %7 = vector.load %arg1[%6, %c0_7, %c0_8] : memref<8x2x96xf32, #tpu.memory_space<vmem>>, vector<1x2x96xf32>
    %8 = vector.shape_cast %7 : vector<1x2x96xf32> to vector<2x96xf32>
    %cst = arith.constant dense<0.000000e+00> : vector<2x96xf32>
    %9 = tpu.matmul %5, %3, %cst {dimension_numbers = #tpu.dot_dimension_numbers<[1], [0], [0], [1], [0, 0, 1, 1], [], []>} : vector<2x32xf32>, vector<32x96xf32>, vector<2x96xf32> -> vector<2x96xf32>
    %10 = vector.extract_strided_slice %8 {offsets = [0, 0], sizes = [2, 32], strides = [1, 1]} : vector<2x96xf32> to vector<2x32xf32>
    %11 = vector.extract_strided_slice %9 {offsets = [0, 0], sizes = [2, 32], strides = [1, 1]} : vector<2x96xf32> to vector<2x32xf32>
    %12 = arith.addf %10, %11 : vector<2x32xf32>
    %13 = arith.negf %12 : vector<2x32xf32>
    %14 = math.exp %13 : vector<2x32xf32>
    %cst_9 = arith.constant 1.000000e+00 : f32
    %15 = vector.broadcast %cst_9 : f32 to vector<2x32xf32>
    %16 = arith.addf %15, %14 : vector<2x32xf32>
    %17 = arith.divf %15, %16 : vector<2x32xf32>
    %18 = vector.extract_strided_slice %8 {offsets = [0, 32], sizes = [2, 32], strides = [1, 1]} : vector<2x96xf32> to vector<2x32xf32>
    %19 = vector.extract_strided_slice %9 {offsets = [0, 32], sizes = [2, 32], strides = [1, 1]} : vector<2x96xf32> to vector<2x32xf32>
    %20 = arith.addf %18, %19 : vector<2x32xf32>
    %21 = arith.negf %20 : vector<2x32xf32>
    %22 = math.exp %21 : vector<2x32xf32>
    %cst_10 = arith.constant 1.000000e+00 : f32
    %23 = vector.broadcast %cst_10 : f32 to vector<2x32xf32>
    %24 = arith.addf %23, %22 : vector<2x32xf32>
    %25 = arith.divf %23, %24 : vector<2x32xf32>
    %26 = vector.extract_strided_slice %8 {offsets = [0, 64], sizes = [2, 32], strides = [1, 1]} : vector<2x96xf32> to vector<2x32xf32>
    %27 = vector.extract_strided_slice %9 {offsets = [0, 64], sizes = [2, 32], strides = [1, 1]} : vector<2x96xf32> to vector<2x32xf32>
    %28 = vector.broadcast %4 : vector<1x32xf32> to vector<2x32xf32>
    %29 = arith.addf %27, %28 : vector<2x32xf32>
    %30 = arith.mulf %17, %29 : vector<2x32xf32>
    %31 = arith.addf %26, %30 : vector<2x32xf32>
    %32 = math.tanh %31 : vector<2x32xf32>
    %cst_11 = arith.constant 1.000000e+00 : f32
    %33 = vector.broadcast %cst_11 : f32 to vector<2x32xf32>
    %34 = arith.subf %33, %25 : vector<2x32xf32>
    %35 = arith.mulf %34, %32 : vector<2x32xf32>
    %36 = arith.mulf %25, %5 : vector<2x32xf32>
    %37 = arith.addf %35, %36 : vector<2x32xf32>
    %38 = arith.index_cast %c0_i32_6 : i32 to index
    %c0_12 = arith.constant 0 : index
    %c0_13 = arith.constant 0 : index
    %39 = vector.load %arg4[%38, %c0_12, %c0_13] : memref<8x2x32xf32, #tpu.memory_space<vmem>>, vector<1x2x32xf32>
    %40 = vector.shape_cast %39 : vector<1x2x32xf32> to vector<2x32xf32>
    %41 = vector.shape_cast %37 : vector<2x32xf32> to vector<1x2x32xf32>
    tpu.vector_store %arg4[%38, %c0_12, %c0_13], %41 {strides = array<i32>} : memref<8x2x32xf32, #tpu.memory_space<vmem>>, vector<1x2x32xf32>,
    %c1_i32 = arith.constant 1 : i32
    %42 = arith.index_cast %c1_i32 : i32 to index
    %c0_14 = arith.constant 0 : index
    %c0_15 = arith.constant 0 : index
    %43 = vector.load %arg1[%42, %c0_14, %c0_15] : memref<8x2x96xf32, #tpu.memory_space<vmem>>, vector<1x2x96xf32>
    %44 = vector.shape_cast %43 : vector<1x2x96xf32> to vector<2x96xf32>
    %cst_16 = arith.constant dense<0.000000e+00> : vector<2x96xf32>
    %45 = tpu.matmul %37, %3, %cst_16 {dimension_numbers = #tpu.dot_dimension_numbers<[1], [0], [0], [1], [0, 0, 1, 1], [], []>} : vector<2x32xf32>, vector<32x96xf32>, vector<2x96xf32> -> vector<2x96xf32>
    %46 = vector.extract_strided_slice %44 {offsets = [0, 0], sizes = [2, 32], strides = [1, 1]} : vector<2x96xf32> to vector<2x32xf32>
    %47 = vector.extract_strided_slice %45 {offsets = [0, 0], sizes = [2, 32], strides = [1, 1]} : vector<2x96xf32> to vector<2x32xf32>
    %48 = arith.addf %46, %47 : vector<2x32xf32>
    %49 = arith.negf %48 : vector<2x32xf32>
    %50 = math.exp %49 : vector<2x32xf32>
    %cst_17 = arith.constant 1.000000e+00 : f32
    %51 = vector.broadcast %cst_17 : f32 to vector<2x32xf32>
    %52 = arith.addf %51, %50 : vector<2x32xf32>
    %53 = arith.divf %51, %52 : vector<2x32xf32>
    %54 = vector.extract_strided_slice %44 {offsets = [0, 32], sizes = [2, 32], strides = [1, 1]} : vector<2x96xf32> to vector<2x32xf32>
    %55 = vector.extract_strided_slice %45 {offsets = [0, 32], sizes = [2, 32], strides = [1, 1]} : vector<2x96xf32> to vector<2x32xf32>
    %56 = arith.addf %54, %55 : vector<2x32xf32>
    %57 = arith.negf %56 : vector<2x32xf32>
    %58 = math.exp %57 : vector<2x32xf32>
    %cst_18 = arith.constant 1.000000e+00 : f32
    %59 = vector.broadcast %cst_18 : f32 to vector<2x32xf32>
    %60 = arith.addf %59, %58 : vector<2x32xf32>
    %61 = arith.divf %59, %60 : vector<2x32xf32>
    %62 = vector.extract_strided_slice %44 {offsets = [0, 64], sizes = [2, 32], strides = [1, 1]} : vector<2x96xf32> to vector<2x32xf32>
    %63 = vector.extract_strided_slice %45 {offsets = [0, 64], sizes = [2, 32], strides = [1, 1]} : vector<2x96xf32> to vector<2x32xf32>
    %64 = vector.broadcast %4 : vector<1x32xf32> to vector<2x32xf32>
    %65 = arith.addf %63, %64 : vector<2x32xf32>
    %66 = arith.mulf %53, %65 : vector<2x32xf32>
    %67 = arith.addf %62, %66 : vector<2x32xf32>
    %68 = math.tanh %67 : vector<2x32xf32>
    %cst_19 = arith.constant 1.000000e+00 : f32
    %69 = vector.broadcast %cst_19 : f32 to vector<2x32xf32>
    %70 = arith.subf %69, %61 : vector<2x32xf32>
    %71 = arith.mulf %70, %68 : vector<2x32xf32>
    %72 = arith.mulf %61, %37 : vector<2x32xf32>
    %73 = arith.addf %71, %72 : vector<2x32xf32>
    %74 = arith.index_cast %c1_i32 : i32 to index
    %c0_20 = arith.constant 0 : index
    %c0_21 = arith.constant 0 : index
    %75 = vector.load %arg4[%74, %c0_20, %c0_21] : memref<8x2x32xf32, #tpu.memory_space<vmem>>, vector<1x2x32xf32>
    %76 = vector.shape_cast %75 : vector<1x2x32xf32> to vector<2x32xf32>
    %77 = vector.shape_cast %73 : vector<2x32xf32> to vector<1x2x32xf32>
    tpu.vector_store %arg4[%74, %c0_20, %c0_21], %77 {strides = array<i32>} : memref<8x2x32xf32, #tpu.memory_space<vmem>>, vector<1x2x32xf32>,
    %c2_i32 = arith.constant 2 : i32
    %78 = arith.index_cast %c2_i32 : i32 to index
    %c0_22 = arith.constant 0 : index
    %c0_23 = arith.constant 0 : index
    %79 = vector.load %arg1[%78, %c0_22, %c0_23] : memref<8x2x96xf32, #tpu.memory_space<vmem>>, vector<1x2x96xf32>
    %80 = vector.shape_cast %79 : vector<1x2x96xf32> to vector<2x96xf32>
    %cst_24 = arith.constant dense<0.000000e+00> : vector<2x96xf32>
    %81 = tpu.matmul %73, %3, %cst_24 {dimension_numbers = #tpu.dot_dimension_numbers<[1], [0], [0], [1], [0, 0, 1, 1], [], []>} : vector<2x32xf32>, vector<32x96xf32>, vector<2x96xf32> -> vector<2x96xf32>
    %82 = vector.extract_strided_slice %80 {offsets = [0, 0], sizes = [2, 32], strides = [1, 1]} : vector<2x96xf32> to vector<2x32xf32>
    %83 = vector.extract_strided_slice %81 {offsets = [0, 0], sizes = [2, 32], strides = [1, 1]} : vector<2x96xf32> to vector<2x32xf32>
    %84 = arith.addf %82, %83 : vector<2x32xf32>
    %85 = arith.negf %84 : vector<2x32xf32>
    %86 = math.exp %85 : vector<2x32xf32>
    %cst_25 = arith.constant 1.000000e+00 : f32
    %87 = vector.broadcast %cst_25 : f32 to vector<2x32xf32>
    %88 = arith.addf %87, %86 : vector<2x32xf32>
    %89 = arith.divf %87, %88 : vector<2x32xf32>
    %90 = vector.extract_strided_slice %80 {offsets = [0, 32], sizes = [2, 32], strides = [1, 1]} : vector<2x96xf32> to vector<2x32xf32>
    %91 = vector.extract_strided_slice %81 {offsets = [0, 32], sizes = [2, 32], strides = [1, 1]} : vector<2x96xf32> to vector<2x32xf32>
    %92 = arith.addf %90, %91 : vector<2x32xf32>
    %93 = arith.negf %92 : vector<2x32xf32>
    %94 = math.exp %93 : vector<2x32xf32>
    %cst_26 = arith.constant 1.000000e+00 : f32
    %95 = vector.broadcast %cst_26 : f32 to vector<2x32xf32>
    %96 = arith.addf %95, %94 : vector<2x32xf32>
    %97 = arith.divf %95, %96 : vector<2x32xf32>
    %98 = vector.extract_strided_slice %80 {offsets = [0, 64], sizes = [2, 32], strides = [1, 1]} : vector<2x96xf32> to vector<2x32xf32>
    %99 = vector.extract_strided_slice %81 {offsets = [0, 64], sizes = [2, 32], strides = [1, 1]} : vector<2x96xf32> to vector<2x32xf32>
    %100 = vector.broadcast %4 : vector<1x32xf32> to vector<2x32xf32>
    %101 = arith.addf %99, %100 : vector<2x32xf32>
    %102 = arith.mulf %89, %101 : vector<2x32xf32>
    %103 = arith.addf %98, %102 : vector<2x32xf32>
    %104 = math.tanh %103 : vector<2x32xf32>
    %cst_27 = arith.constant 1.000000e+00 : f32
    %105 = vector.broadcast %cst_27 : f32 to vector<2x32xf32>
    %106 = arith.subf %105, %97 : vector<2x32xf32>
    %107 = arith.mulf %106, %104 : vector<2x32xf32>
    %108 = arith.mulf %97, %73 : vector<2x32xf32>
    %109 = arith.addf %107, %108 : vector<2x32xf32>
    %110 = arith.index_cast %c2_i32 : i32 to index
    %c0_28 = arith.constant 0 : index
    %c0_29 = arith.constant 0 : index
    %111 = vector.load %arg4[%110, %c0_28, %c0_29] : memref<8x2x32xf32, #tpu.memory_space<vmem>>, vector<1x2x32xf32>
    %112 = vector.shape_cast %111 : vector<1x2x32xf32> to vector<2x32xf32>
    %113 = vector.shape_cast %109 : vector<2x32xf32> to vector<1x2x32xf32>
    tpu.vector_store %arg4[%110, %c0_28, %c0_29], %113 {strides = array<i32>} : memref<8x2x32xf32, #tpu.memory_space<vmem>>, vector<1x2x32xf32>,
    %c3_i32 = arith.constant 3 : i32
    %114 = arith.index_cast %c3_i32 : i32 to index
    %c0_30 = arith.constant 0 : index
    %c0_31 = arith.constant 0 : index
    %115 = vector.load %arg1[%114, %c0_30, %c0_31] : memref<8x2x96xf32, #tpu.memory_space<vmem>>, vector<1x2x96xf32>
    %116 = vector.shape_cast %115 : vector<1x2x96xf32> to vector<2x96xf32>
    %cst_32 = arith.constant dense<0.000000e+00> : vector<2x96xf32>
    %117 = tpu.matmul %109, %3, %cst_32 {dimension_numbers = #tpu.dot_dimension_numbers<[1], [0], [0], [1], [0, 0, 1, 1], [], []>} : vector<2x32xf32>, vector<32x96xf32>, vector<2x96xf32> -> vector<2x96xf32>
    %118 = vector.extract_strided_slice %116 {offsets = [0, 0], sizes = [2, 32], strides = [1, 1]} : vector<2x96xf32> to vector<2x32xf32>
    %119 = vector.extract_strided_slice %117 {offsets = [0, 0], sizes = [2, 32], strides = [1, 1]} : vector<2x96xf32> to vector<2x32xf32>
    %120 = arith.addf %118, %119 : vector<2x32xf32>
    %121 = arith.negf %120 : vector<2x32xf32>
    %122 = math.exp %121 : vector<2x32xf32>
    %cst_33 = arith.constant 1.000000e+00 : f32
    %123 = vector.broadcast %cst_33 : f32 to vector<2x32xf32>
    %124 = arith.addf %123, %122 : vector<2x32xf32>
    %125 = arith.divf %123, %124 : vector<2x32xf32>
    %126 = vector.extract_strided_slice %116 {offsets = [0, 32], sizes = [2, 32], strides = [1, 1]} : vector<2x96xf32> to vector<2x32xf32>
    %127 = vector.extract_strided_slice %117 {offsets = [0, 32], sizes = [2, 32], strides = [1, 1]} : vector<2x96xf32> to vector<2x32xf32>
    %128 = arith.addf %126, %127 : vector<2x32xf32>
    %129 = arith.negf %128 : vector<2x32xf32>
    %130 = math.exp %129 : vector<2x32xf32>
    %cst_34 = arith.constant 1.000000e+00 : f32
    %131 = vector.broadcast %cst_34 : f32 to vector<2x32xf32>
    %132 = arith.addf %131, %130 : vector<2x32xf32>
    %133 = arith.divf %131, %132 : vector<2x32xf32>
    %134 = vector.extract_strided_slice %116 {offsets = [0, 64], sizes = [2, 32], strides = [1, 1]} : vector<2x96xf32> to vector<2x32xf32>
    %135 = vector.extract_strided_slice %117 {offsets = [0, 64], sizes = [2, 32], strides = [1, 1]} : vector<2x96xf32> to vector<2x32xf32>
    %136 = vector.broadcast %4 : vector<1x32xf32> to vector<2x32xf32>
    %137 = arith.addf %135, %136 : vector<2x32xf32>
    %138 = arith.mulf %125, %137 : vector<2x32xf32>
    %139 = arith.addf %134, %138 : vector<2x32xf32>
    %140 = math.tanh %139 : vector<2x32xf32>
    %cst_35 = arith.constant 1.000000e+00 : f32
    %141 = vector.broadcast %cst_35 : f32 to vector<2x32xf32>
    %142 = arith.subf %141, %133 : vector<2x32xf32>
    %143 = arith.mulf %142, %140 : vector<2x32xf32>
    %144 = arith.mulf %133, %109 : vector<2x32xf32>
    %145 = arith.addf %143, %144 : vector<2x32xf32>
    %146 = arith.index_cast %c3_i32 : i32 to index
    %c0_36 = arith.constant 0 : index
    %c0_37 = arith.constant 0 : index
    %147 = vector.load %arg4[%146, %c0_36, %c0_37] : memref<8x2x32xf32, #tpu.memory_space<vmem>>, vector<1x2x32xf32>
    %148 = vector.shape_cast %147 : vector<1x2x32xf32> to vector<2x32xf32>
    %149 = vector.shape_cast %145 : vector<2x32xf32> to vector<1x2x32xf32>
    tpu.vector_store %arg4[%146, %c0_36, %c0_37], %149 {strides = array<i32>} : memref<8x2x32xf32, #tpu.memory_space<vmem>>, vector<1x2x32xf32>,
    %c4_i32 = arith.constant 4 : i32
    %150 = arith.index_cast %c4_i32 : i32 to index
    %c0_38 = arith.constant 0 : index
    %c0_39 = arith.constant 0 : index
    %151 = vector.load %arg1[%150, %c0_38, %c0_39] : memref<8x2x96xf32, #tpu.memory_space<vmem>>, vector<1x2x96xf32>
    %152 = vector.shape_cast %151 : vector<1x2x96xf32> to vector<2x96xf32>
    %cst_40 = arith.constant dense<0.000000e+00> : vector<2x96xf32>
    %153 = tpu.matmul %145, %3, %cst_40 {dimension_numbers = #tpu.dot_dimension_numbers<[1], [0], [0], [1], [0, 0, 1, 1], [], []>} : vector<2x32xf32>, vector<32x96xf32>, vector<2x96xf32> -> vector<2x96xf32>
    %154 = vector.extract_strided_slice %152 {offsets = [0, 0], sizes = [2, 32], strides = [1, 1]} : vector<2x96xf32> to vector<2x32xf32>
    %155 = vector.extract_strided_slice %153 {offsets = [0, 0], sizes = [2, 32], strides = [1, 1]} : vector<2x96xf32> to vector<2x32xf32>
    %156 = arith.addf %154, %155 : vector<2x32xf32>
    %157 = arith.negf %156 : vector<2x32xf32>
    %158 = math.exp %157 : vector<2x32xf32>
    %cst_41 = arith.constant 1.000000e+00 : f32
    %159 = vector.broadcast %cst_41 : f32 to vector<2x32xf32>
    %160 = arith.addf %159, %158 : vector<2x32xf32>
    %161 = arith.divf %159, %160 : vector<2x32xf32>
    %162 = vector.extract_strided_slice %152 {offsets = [0, 32], sizes = [2, 32], strides = [1, 1]} : vector<2x96xf32> to vector<2x32xf32>
    %163 = vector.extract_strided_slice %153 {offsets = [0, 32], sizes = [2, 32], strides = [1, 1]} : vector<2x96xf32> to vector<2x32xf32>
    %164 = arith.addf %162, %163 : vector<2x32xf32>
    %165 = arith.negf %164 : vector<2x32xf32>
    %166 = math.exp %165 : vector<2x32xf32>
    %cst_42 = arith.constant 1.000000e+00 : f32
    %167 = vector.broadcast %cst_42 : f32 to vector<2x32xf32>
    %168 = arith.addf %167, %166 : vector<2x32xf32>
    %169 = arith.divf %167, %168 : vector<2x32xf32>
    %170 = vector.extract_strided_slice %152 {offsets = [0, 64], sizes = [2, 32], strides = [1, 1]} : vector<2x96xf32> to vector<2x32xf32>
    %171 = vector.extract_strided_slice %153 {offsets = [0, 64], sizes = [2, 32], strides = [1, 1]} : vector<2x96xf32> to vector<2x32xf32>
    %172 = vector.broadcast %4 : vector<1x32xf32> to vector<2x32xf32>
    %173 = arith.addf %171, %172 : vector<2x32xf32>
    %174 = arith.mulf %161, %173 : vector<2x32xf32>
    %175 = arith.addf %170, %174 : vector<2x32xf32>
    %176 = math.tanh %175 : vector<2x32xf32>
    %cst_43 = arith.constant 1.000000e+00 : f32
    %177 = vector.broadcast %cst_43 : f32 to vector<2x32xf32>
    %178 = arith.subf %177, %169 : vector<2x32xf32>
    %179 = arith.mulf %178, %176 : vector<2x32xf32>
    %180 = arith.mulf %169, %145 : vector<2x32xf32>
    %181 = arith.addf %179, %180 : vector<2x32xf32>
    %182 = arith.index_cast %c4_i32 : i32 to index
    %c0_44 = arith.constant 0 : index
    %c0_45 = arith.constant 0 : index
    %183 = vector.load %arg4[%182, %c0_44, %c0_45] : memref<8x2x32xf32, #tpu.memory_space<vmem>>, vector<1x2x32xf32>
    %184 = vector.shape_cast %183 : vector<1x2x32xf32> to vector<2x32xf32>
    %185 = vector.shape_cast %181 : vector<2x32xf32> to vector<1x2x32xf32>
    tpu.vector_store %arg4[%182, %c0_44, %c0_45], %185 {strides = array<i32>} : memref<8x2x32xf32, #tpu.memory_space<vmem>>, vector<1x2x32xf32>,
    %c5_i32 = arith.constant 5 : i32
    %186 = arith.index_cast %c5_i32 : i32 to index
    %c0_46 = arith.constant 0 : index
    %c0_47 = arith.constant 0 : index
    %187 = vector.load %arg1[%186, %c0_46, %c0_47] : memref<8x2x96xf32, #tpu.memory_space<vmem>>, vector<1x2x96xf32>
    %188 = vector.shape_cast %187 : vector<1x2x96xf32> to vector<2x96xf32>
    %cst_48 = arith.constant dense<0.000000e+00> : vector<2x96xf32>
    %189 = tpu.matmul %181, %3, %cst_48 {dimension_numbers = #tpu.dot_dimension_numbers<[1], [0], [0], [1], [0, 0, 1, 1], [], []>} : vector<2x32xf32>, vector<32x96xf32>, vector<2x96xf32> -> vector<2x96xf32>
    %190 = vector.extract_strided_slice %188 {offsets = [0, 0], sizes = [2, 32], strides = [1, 1]} : vector<2x96xf32> to vector<2x32xf32>
    %191 = vector.extract_strided_slice %189 {offsets = [0, 0], sizes = [2, 32], strides = [1, 1]} : vector<2x96xf32> to vector<2x32xf32>
    %192 = arith.addf %190, %191 : vector<2x32xf32>
    %193 = arith.negf %192 : vector<2x32xf32>
    %194 = math.exp %193 : vector<2x32xf32>
    %cst_49 = arith.constant 1.000000e+00 : f32
    %195 = vector.broadcast %cst_49 : f32 to vector<2x32xf32>
    %196 = arith.addf %195, %194 : vector<2x32xf32>
    %197 = arith.divf %195, %196 : vector<2x32xf32>
    %198 = vector.extract_strided_slice %188 {offsets = [0, 32], sizes = [2, 32], strides = [1, 1]} : vector<2x96xf32> to vector<2x32xf32>
    %199 = vector.extract_strided_slice %189 {offsets = [0, 32], sizes = [2, 32], strides = [1, 1]} : vector<2x96xf32> to vector<2x32xf32>
    %200 = arith.addf %198, %199 : vector<2x32xf32>
    %201 = arith.negf %200 : vector<2x32xf32>
    %202 = math.exp %201 : vector<2x32xf32>
    %cst_50 = arith.constant 1.000000e+00 : f32
    %203 = vector.broadcast %cst_50 : f32 to vector<2x32xf32>
    %204 = arith.addf %203, %202 : vector<2x32xf32>
    %205 = arith.divf %203, %204 : vector<2x32xf32>
    %206 = vector.extract_strided_slice %188 {offsets = [0, 64], sizes = [2, 32], strides = [1, 1]} : vector<2x96xf32> to vector<2x32xf32>
    %207 = vector.extract_strided_slice %189 {offsets = [0, 64], sizes = [2, 32], strides = [1, 1]} : vector<2x96xf32> to vector<2x32xf32>
    %208 = vector.broadcast %4 : vector<1x32xf32> to vector<2x32xf32>
    %209 = arith.addf %207, %208 : vector<2x32xf32>
    %210 = arith.mulf %197, %209 : vector<2x32xf32>
    %211 = arith.addf %206, %210 : vector<2x32xf32>
    %212 = math.tanh %211 : vector<2x32xf32>
    %cst_51 = arith.constant 1.000000e+00 : f32
    %213 = vector.broadcast %cst_51 : f32 to vector<2x32xf32>
    %214 = arith.subf %213, %205 : vector<2x32xf32>
    %215 = arith.mulf %214, %212 : vector<2x32xf32>
    %216 = arith.mulf %205, %181 : vector<2x32xf32>
    %217 = arith.addf %215, %216 : vector<2x32xf32>
    %218 = arith.index_cast %c5_i32 : i32 to index
    %c0_52 = arith.constant 0 : index
    %c0_53 = arith.constant 0 : index
    %219 = vector.load %arg4[%218, %c0_52, %c0_53] : memref<8x2x32xf32, #tpu.memory_space<vmem>>, vector<1x2x32xf32>
    %220 = vector.shape_cast %219 : vector<1x2x32xf32> to vector<2x32xf32>
    %221 = vector.shape_cast %217 : vector<2x32xf32> to vector<1x2x32xf32>
    tpu.vector_store %arg4[%218, %c0_52, %c0_53], %221 {strides = array<i32>} : memref<8x2x32xf32, #tpu.memory_space<vmem>>, vector<1x2x32xf32>,
    %c6_i32 = arith.constant 6 : i32
    %222 = arith.index_cast %c6_i32 : i32 to index
    %c0_54 = arith.constant 0 : index
    %c0_55 = arith.constant 0 : index
    %223 = vector.load %arg1[%222, %c0_54, %c0_55] : memref<8x2x96xf32, #tpu.memory_space<vmem>>, vector<1x2x96xf32>
    %224 = vector.shape_cast %223 : vector<1x2x96xf32> to vector<2x96xf32>
    %cst_56 = arith.constant dense<0.000000e+00> : vector<2x96xf32>
    %225 = tpu.matmul %217, %3, %cst_56 {dimension_numbers = #tpu.dot_dimension_numbers<[1], [0], [0], [1], [0, 0, 1, 1], [], []>} : vector<2x32xf32>, vector<32x96xf32>, vector<2x96xf32> -> vector<2x96xf32>
    %226 = vector.extract_strided_slice %224 {offsets = [0, 0], sizes = [2, 32], strides = [1, 1]} : vector<2x96xf32> to vector<2x32xf32>
    %227 = vector.extract_strided_slice %225 {offsets = [0, 0], sizes = [2, 32], strides = [1, 1]} : vector<2x96xf32> to vector<2x32xf32>
    %228 = arith.addf %226, %227 : vector<2x32xf32>
    %229 = arith.negf %228 : vector<2x32xf32>
    %230 = math.exp %229 : vector<2x32xf32>
    %cst_57 = arith.constant 1.000000e+00 : f32
    %231 = vector.broadcast %cst_57 : f32 to vector<2x32xf32>
    %232 = arith.addf %231, %230 : vector<2x32xf32>
    %233 = arith.divf %231, %232 : vector<2x32xf32>
    %234 = vector.extract_strided_slice %224 {offsets = [0, 32], sizes = [2, 32], strides = [1, 1]} : vector<2x96xf32> to vector<2x32xf32>
    %235 = vector.extract_strided_slice %225 {offsets = [0, 32], sizes = [2, 32], strides = [1, 1]} : vector<2x96xf32> to vector<2x32xf32>
    %236 = arith.addf %234, %235 : vector<2x32xf32>
    %237 = arith.negf %236 : vector<2x32xf32>
    %238 = math.exp %237 : vector<2x32xf32>
    %cst_58 = arith.constant 1.000000e+00 : f32
    %239 = vector.broadcast %cst_58 : f32 to vector<2x32xf32>
    %240 = arith.addf %239, %238 : vector<2x32xf32>
    %241 = arith.divf %239, %240 : vector<2x32xf32>
    %242 = vector.extract_strided_slice %224 {offsets = [0, 64], sizes = [2, 32], strides = [1, 1]} : vector<2x96xf32> to vector<2x32xf32>
    %243 = vector.extract_strided_slice %225 {offsets = [0, 64], sizes = [2, 32], strides = [1, 1]} : vector<2x96xf32> to vector<2x32xf32>
    %244 = vector.broadcast %4 : vector<1x32xf32> to vector<2x32xf32>
    %245 = arith.addf %243, %244 : vector<2x32xf32>
    %246 = arith.mulf %233, %245 : vector<2x32xf32>
    %247 = arith.addf %242, %246 : vector<2x32xf32>
    %248 = math.tanh %247 : vector<2x32xf32>
    %cst_59 = arith.constant 1.000000e+00 : f32
    %249 = vector.broadcast %cst_59 : f32 to vector<2x32xf32>
    %250 = arith.subf %249, %241 : vector<2x32xf32>
    %251 = arith.mulf %250, %248 : vector<2x32xf32>
    %252 = arith.mulf %241, %217 : vector<2x32xf32>
    %253 = arith.addf %251, %252 : vector<2x32xf32>
    %254 = arith.index_cast %c6_i32 : i32 to index
    %c0_60 = arith.constant 0 : index
    %c0_61 = arith.constant 0 : index
    %255 = vector.load %arg4[%254, %c0_60, %c0_61] : memref<8x2x32xf32, #tpu.memory_space<vmem>>, vector<1x2x32xf32>
    %256 = vector.shape_cast %255 : vector<1x2x32xf32> to vector<2x32xf32>
    %257 = vector.shape_cast %253 : vector<2x32xf32> to vector<1x2x32xf32>
    tpu.vector_store %arg4[%254, %c0_60, %c0_61], %257 {strides = array<i32>} : memref<8x2x32xf32, #tpu.memory_space<vmem>>, vector<1x2x32xf32>,
    %c7_i32 = arith.constant 7 : i32
    %258 = arith.index_cast %c7_i32 : i32 to index
    %c0_62 = arith.constant 0 : index
    %c0_63 = arith.constant 0 : index
    %259 = vector.load %arg1[%258, %c0_62, %c0_63] : memref<8x2x96xf32, #tpu.memory_space<vmem>>, vector<1x2x96xf32>
    %260 = vector.shape_cast %259 : vector<1x2x96xf32> to vector<2x96xf32>
    %cst_64 = arith.constant dense<0.000000e+00> : vector<2x96xf32>
    %261 = tpu.matmul %253, %3, %cst_64 {dimension_numbers = #tpu.dot_dimension_numbers<[1], [0], [0], [1], [0, 0, 1, 1], [], []>} : vector<2x32xf32>, vector<32x96xf32>, vector<2x96xf32> -> vector<2x96xf32>
    %262 = vector.extract_strided_slice %260 {offsets = [0, 0], sizes = [2, 32], strides = [1, 1]} : vector<2x96xf32> to vector<2x32xf32>
    %263 = vector.extract_strided_slice %261 {offsets = [0, 0], sizes = [2, 32], strides = [1, 1]} : vector<2x96xf32> to vector<2x32xf32>
    %264 = arith.addf %262, %263 : vector<2x32xf32>
    %265 = arith.negf %264 : vector<2x32xf32>
    %266 = math.exp %265 : vector<2x32xf32>
    %cst_65 = arith.constant 1.000000e+00 : f32
    %267 = vector.broadcast %cst_65 : f32 to vector<2x32xf32>
    %268 = arith.addf %267, %266 : vector<2x32xf32>
    %269 = arith.divf %267, %268 : vector<2x32xf32>
    %270 = vector.extract_strided_slice %260 {offsets = [0, 32], sizes = [2, 32], strides = [1, 1]} : vector<2x96xf32> to vector<2x32xf32>
    %271 = vector.extract_strided_slice %261 {offsets = [0, 32], sizes = [2, 32], strides = [1, 1]} : vector<2x96xf32> to vector<2x32xf32>
    %272 = arith.addf %270, %271 : vector<2x32xf32>
    %273 = arith.negf %272 : vector<2x32xf32>
    %274 = math.exp %273 : vector<2x32xf32>
    %cst_66 = arith.constant 1.000000e+00 : f32
    %275 = vector.broadcast %cst_66 : f32 to vector<2x32xf32>
    %276 = arith.addf %275, %274 : vector<2x32xf32>
    %277 = arith.divf %275, %276 : vector<2x32xf32>
    %278 = vector.extract_strided_slice %260 {offsets = [0, 64], sizes = [2, 32], strides = [1, 1]} : vector<2x96xf32> to vector<2x32xf32>
    %279 = vector.extract_strided_slice %261 {offsets = [0, 64], sizes = [2, 32], strides = [1, 1]} : vector<2x96xf32> to vector<2x32xf32>
    %280 = vector.broadcast %4 : vector<1x32xf32> to vector<2x32xf32>
    %281 = arith.addf %279, %280 : vector<2x32xf32>
    %282 = arith.mulf %269, %281 : vector<2x32xf32>
    %283 = arith.addf %278, %282 : vector<2x32xf32>
    %284 = math.tanh %283 : vector<2x32xf32>
    %cst_67 = arith.constant 1.000000e+00 : f32
    %285 = vector.broadcast %cst_67 : f32 to vector<2x32xf32>
    %286 = arith.subf %285, %277 : vector<2x32xf32>
    %287 = arith.mulf %286, %284 : vector<2x32xf32>
    %288 = arith.mulf %277, %253 : vector<2x32xf32>
    %289 = arith.addf %287, %288 : vector<2x32xf32>
    %290 = arith.index_cast %c7_i32 : i32 to index
    %c0_68 = arith.constant 0 : index
    %c0_69 = arith.constant 0 : index
    %291 = vector.load %arg4[%290, %c0_68, %c0_69] : memref<8x2x32xf32, #tpu.memory_space<vmem>>, vector<1x2x32xf32>
    %292 = vector.shape_cast %291 : vector<1x2x32xf32> to vector<2x32xf32>
    %293 = vector.shape_cast %289 : vector<2x32xf32> to vector<1x2x32xf32>
    tpu.vector_store %arg4[%290, %c0_68, %c0_69], %293 {strides = array<i32>} : memref<8x2x32xf32, #tpu.memory_space<vmem>>, vector<1x2x32xf32>,
    %c8_i32 = arith.constant 8 : i32
    %c0_70 = arith.constant 0 : index
    %c0_71 = arith.constant 0 : index
    %294 = vector.load %arg5[%c0_70, %c0_71] : memref<2x32xf32, #tpu.memory_space<vmem>>, vector<2x32xf32>
    tpu.vector_store %arg5[%c0_70, %c0_71], %289 {strides = array<i32>} : memref<2x32xf32, #tpu.memory_space<vmem>>, vector<2x32xf32>,
    return
  }
  func.func @transform_0(%arg0: i32) -> (i32, i32, i32) {
    %c0_i32 = arith.constant 0 : i32
    %c0_i32_0 = arith.constant 0 : i32
    %c0_i32_1 = arith.constant 0 : i32
    return %arg0, %c0_i32, %c0_i32_0 : i32, i32, i32
  }
  func.func @transform_1(%arg0: i32) -> (i32, i32) {
    %c0_i32 = arith.constant 0 : i32
    %c0_i32_0 = arith.constant 0 : i32
    %c0_i32_1 = arith.constant 0 : i32
    return %c0_i32, %c0_i32_0 : i32, i32
  }
  func.func @transform_2(%arg0: i32) -> (i32, i32) {
    %c0_i32 = arith.constant 0 : i32
    %c0_i32_0 = arith.constant 0 : i32
    %c0_i32_1 = arith.constant 0 : i32
    return %c0_i32, %c0_i32_0 : i32, i32
  }
  func.func @transform_3(%arg0: i32) -> (i32, i32, i32) {
    %c0_i32 = arith.constant 0 : i32
    %c0_i32_0 = arith.constant 0 : i32
    %c0_i32_1 = arith.constant 0 : i32
    return %arg0, %c0_i32, %c0_i32_0 : i32, i32, i32
  }
}

module attributes {stable_mosaic.version = 11 : i64} {
  func.func @_matmul_bias_kernel(%arg0: i32, %arg1: memref<16x32xf32, #tpu.memory_space<vmem>>, %arg2: memref<32x8xf32, #tpu.memory_space<vmem>>, %arg3: memref<1x8xf32, #tpu.memory_space<vmem>>, %arg4: memref<16x8xf32, #tpu.memory_space<vmem>>) attributes {dimension_semantics = [#tpu.dimension_semantics<parallel>], iteration_bounds = array<i64: 1>, scalar_prefetch = 0 : i64, scratch_operands = 0 : i64, tpu.core_type = #tpu.core_type<tc>, window_params = [{transform_indices = @transform_0, window_bounds = array<i64: 16, 32>}, {pipeline_mode = #tpu.pipeline_mode<synchronous>, transform_indices = @transform_1, window_bounds = array<i64: 32, 8>}, {pipeline_mode = #tpu.pipeline_mode<synchronous>, transform_indices = @transform_2, window_bounds = array<i64: 1, 8>}, {transform_indices = @transform_3, window_bounds = array<i64: 16, 8>}]} {
    %c0 = arith.constant 0 : index
    %c0_0 = arith.constant 0 : index
    %0 = vector.load %arg1[%c0, %c0_0] : memref<16x32xf32, #tpu.memory_space<vmem>>, vector<16x32xf32>
    %c0_1 = arith.constant 0 : index
    %c0_2 = arith.constant 0 : index
    %1 = vector.load %arg2[%c0_1, %c0_2] : memref<32x8xf32, #tpu.memory_space<vmem>>, vector<32x8xf32>
    %cst = arith.constant dense<0.000000e+00> : vector<16x8xf32>
    %2 = tpu.matmul %0, %1, %cst {dimension_numbers = #tpu.dot_dimension_numbers<[1], [0], [0], [1], [0, 0, 1, 1], [], []>} : vector<16x32xf32>, vector<32x8xf32>, vector<16x8xf32> -> vector<16x8xf32>
    %c0_3 = arith.constant 0 : index
    %c0_4 = arith.constant 0 : index
    %3 = vector.load %arg3[%c0_3, %c0_4] : memref<1x8xf32, #tpu.memory_space<vmem>>, vector<1x8xf32>
    %4 = vector.broadcast %3 : vector<1x8xf32> to vector<16x8xf32>
    %5 = arith.addf %2, %4 : vector<16x8xf32>
    %c0_5 = arith.constant 0 : index
    %c0_6 = arith.constant 0 : index
    %6 = vector.load %arg4[%c0_5, %c0_6] : memref<16x8xf32, #tpu.memory_space<vmem>>, vector<16x8xf32>
    tpu.vector_store %arg4[%c0_5, %c0_6], %5 {strides = array<i32>} : memref<16x8xf32, #tpu.memory_space<vmem>>, vector<16x8xf32>,
    return
  }
  func.func @transform_0(%arg0: i32) -> (i32, i32) {
    %c0_i32 = arith.constant 0 : i32
    %c0_i32_0 = arith.constant 0 : i32
    return %arg0, %c0_i32 : i32, i32
  }
  func.func @transform_1(%arg0: i32) -> (i32, i32) {
    %c0_i32 = arith.constant 0 : i32
    %c0_i32_0 = arith.constant 0 : i32
    %c0_i32_1 = arith.constant 0 : i32
    return %c0_i32, %c0_i32_0 : i32, i32
  }
  func.func @transform_2(%arg0: i32) -> (i32, i32) {
    %c0_i32 = arith.constant 0 : i32
    %c0_i32_0 = arith.constant 0 : i32
    %c0_i32_1 = arith.constant 0 : i32
    return %c0_i32, %c0_i32_0 : i32, i32
  }
  func.func @transform_3(%arg0: i32) -> (i32, i32) {
    %c0_i32 = arith.constant 0 : i32
    %c0_i32_0 = arith.constant 0 : i32
    return %arg0, %c0_i32 : i32, i32
  }
}

</mosaic_0001>

<llo_original>
// kernel: gru_model_forward.5
$region0: #{gru_model_forward.5}
  #allocation0 [shape = 'u32[]', space=smem, size = 0x4, offset = 0x4, fixed_abs, tag = 'smem constant byte address 0x4 - core index']
  #allocation1 [shape = 'u32[144,128]{1,0:T(1,128)}', space=vmem, size = 0x12000, scoped, tag = 'internal scratch']
  %s0 = inlined_call_operand.vmem [shape: f32[16,16], index: 0, kind: input, shape index: {}]
  %s1 = inlined_call_operand.vmem [shape: f32[16,96], index: 1, kind: input, shape index: {}]
  %s2 = inlined_call_operand.vmem [shape: f32[1,96], index: 2, kind: input, shape index: {}]
  %s3 = inlined_call_operand.vmem [shape: f32[16,96], index: 3, kind: output, shape index: {}]
  %s4 = sld [smem:[#allocation0]]
  $region22: #{gru_model_forward.5} parent=0
    _
  %s6 = ssub.s32 1, %s4
  %s7 = scalar_select 0, %s6, %s4
  // Predicated region
  $region2: #{gru_model_forward.5} parent=0 // pred_check
    _
  $region3: #{gru_model_forward.5} parent=0 // pred_check_branch
    %9 = sbr.rel (0) target = $region5
  $region4: #{gru_model_forward.5} parent=0 // pred_region
    _
  $region5: #{gru_model_forward.5} parent=0 // pred_fallthru
    _
  // Predicated region
  $region6: #{gru_model_forward.5} parent=0 // pred_check
    _
  $region7: #{gru_model_forward.5} parent=0 // pred_check_branch
    %11 = sbr.rel (0) target = $region9
  $region8: #{gru_model_forward.5} parent=0 // pred_region
    _
  $region9: #{gru_model_forward.5} parent=0 // pred_fallthru
    _
  // Predicated region
  $region10: #{gru_model_forward.5} parent=0 // pred_check
    _
  $region11: #{gru_model_forward.5} parent=0 // pred_check_branch
    %13 = sbr.rel (0) target = $region13
  $region12: #{gru_model_forward.5} parent=0 // pred_region
    _
  $region13: #{gru_model_forward.5} parent=0 // pred_fallthru
    _
  %v14 = vld [vmem:[%s0] sm:$0xff]
  %v15 = vld [vmem:[%s0 + $0x8] sm:$0xff]
  %v16 = vld [vmem:[%s1] sm:$0xff]
  %v17 = vld [vmem:[%s1 + $0x8] sm:$0xff]
  %v18 = vld [vmem:[%s2] sm:$0x1]
  %v20 = vlaneseq
  %v21 = vshrl.u32 %v20, 7
  %v22 = vsub.s32 0, %v21
  %v23 = vrot.slane %v18, %v22
  %vm25 = vcmask 130048
  %v27 = vsel %vm25, %v14, 0
  %v30 = vsel %vm25, %v15, 0
  %32 = vmatprep.subr.mxu0 0.0
  %33 = vmatpush1.msra.mxu0 0.0
  %34 = vmatprep.subr.mxu0 0.0
  %35 = vmatpush1.msra.mxu0 0.0
  %36 = vmatprep.subr.mxu0 0.0
  %37 = vmatpush1.msra.mxu0 0.0
  %38 = vmatprep.subr.mxu0 0.0
  %39 = vmatpush1.msra.mxu0 0.0
  %40 = vmatprep.subr.mxu0 0.0
  %41 = vmatpush1.msra.mxu0 0.0
  %42 = vmatprep.subr.mxu0 0.0
  %43 = vmatpush1.msra.mxu0 0.0
  %44 = vmatprep.subr.mxu0 0.0
  %45 = vmatpush1.msra.mxu0 0.0
  %46 = vmatprep.subr.mxu0 0.0
  %47 = vmatpush1.msra.mxu0 0.0
  %48 = vmatprep.subr.mxu0 0.0
  %49 = vmatpush1.msra.mxu0 0.0
  %50 = vmatprep.subr.mxu0 0.0
  %51 = vmatpush1.msra.mxu0 0.0
  %52 = vmatprep.subr.mxu0 0.0
  %53 = vmatpush1.msra.mxu0 0.0
  %54 = vmatprep.subr.mxu0 0.0
  %55 = vmatpush1.msra.mxu0 0.0
  %56 = vmatprep.subr.mxu0 0.0
  %57 = vmatpush1.msra.mxu0 0.0
  %58 = vmatprep.subr.mxu0 0.0
  %59 = vmatpush1.msra.mxu0 0.0
  %60 = vmatprep.subr.mxu0 0.0
  %61 = vmatpush1.msra.mxu0 %v17
  %62 = vmatprep.subr.mxu0 0.0
  %63 = vmatpush1.msra.mxu0 %v16
  %64 = vmatprep.subr.mxu0 0.0
  %65 = vmatpush2.msra.mxu0 0.0
  %66 = vmatprep.subr.mxu0 0.0
  %67 = vmatpush2.msra.mxu0 0.0
  %68 = vmatprep.subr.mxu0 0.0
  %69 = vmatpush2.msra.mxu0 0.0
  %70 = vmatprep.subr.mxu0 0.0
  %71 = vmatpush2.msra.mxu0 0.0
  %72 = vmatprep.subr.mxu0 0.0
  %73 = vmatpush2.msra.mxu0 0.0
  %74 = vmatprep.subr.mxu0 0.0
  %75 = vmatpush2.msra.mxu0 0.0
  %76 = vmatprep.subr.mxu0 0.0
  %77 = vmatpush2.msra.mxu0 0.0
  %78 = vmatprep.subr.mxu0 0.0
  %79 = vmatpush2.msra.mxu0 0.0
  %80 = vmatprep.subr.mxu0 0.0
  %81 = vmatpush2.msra.mxu0 0.0
  %82 = vmatprep.subr.mxu0 0.0
  %83 = vmatpush2.msra.mxu0 0.0
  %84 = vmatprep.subr.mxu0 0.0
  %85 = vmatpush2.msra.mxu0 0.0
  %86 = vmatprep.subr.mxu0 0.0
  %87 = vmatpush2.msra.mxu0 0.0
  %88 = vmatprep.subr.mxu0 0.0
  %89 = vmatpush2.msra.mxu0 0.0
  %90 = vmatprep.subr.mxu0 0.0
  %91 = vmatpush2.msra.mxu0 0.0
  %92 = vmatprep.subr.mxu0 0.0
  %93 = vmatpush2.msra.mxu0 0.0
  %94 = vmatprep.subr.mxu0 0.0
  %95 = vmatpush2.msra.mxu0 0.0
  %96 = vmatprep.mubr.f32.mxu0 0.0
  %97 = vmatmul.mubr.f32.gmra.mxu0 %v27
  %v98 = vpop.f32.mrf.mxu0
  %v99 = vadd.f32 %v23, %v98
  %v100 = vpop.f32.mrf.mxu0
  %101 = vmatprep.mubr.f32.mxu0 0.0
  %102 = vmatmul.mubr.f32.gmra.mxu0 %v30
  %v103 = vpop.f32.mrf.mxu0
  %v104 = vadd.f32 %v23, %v103
  %v105 = vpop.f32.mrf.mxu0
  %106 = vdwg.mxu0
  %vm107 = vcmask 785408
  %108 = vst.msk [vmem:[%s3] sm:$0xff] %vm107, %v99
  %109 = vst.msk [vmem:[%s3 + $0x8] sm:$0xff] %vm107, %v104
  // Predicated region
  $region14: #{gru_model_forward.5} parent=0 // pred_check
    _
  $region15: #{gru_model_forward.5} parent=0 // pred_check_branch
    %111 = sbr.rel (0) target = $region17
  $region16: #{gru_model_forward.5} parent=0 // pred_region
    _
  $region17: #{gru_model_forward.5} parent=0 // pred_fallthru
    _
  // Predicated region
  $region18: #{gru_model_forward.5} parent=0 // pred_check
    _
  $region19: #{gru_model_forward.5} parent=0 // pred_check_branch
    %113 = sbr.rel (0) target = $region21
  $region20: #{gru_model_forward.5} parent=0 // pred_region
    _
  $region21: #{gru_model_forward.5} parent=0 // pred_fallthru
    _

// kernel: gru_model_forward.7
$region0: #{gru_model_forward.7}
  #allocation0 [shape = 'u32[]', space=smem, size = 0x4, offset = 0x4, fixed_abs, tag = 'smem constant byte address 0x4 - core index']
  #allocation1 [shape = 'u32[144,128]{1,0:T(1,128)}', space=vmem, size = 0x12000, scoped, tag = 'internal scratch']
  %s0 = inlined_call_operand.vmem [shape: f32[16,32], index: 0, kind: input, shape index: {}]
  %s1 = inlined_call_operand.vmem [shape: f32[32,96], index: 1, kind: input, shape index: {}]
  %s2 = inlined_call_operand.vmem [shape: f32[1,96], index: 2, kind: input, shape index: {}]
  %s3 = inlined_call_operand.vmem [shape: f32[16,96], index: 3, kind: output, shape index: {}]
  %s4 = sld [smem:[#allocation0]]
  $region22: #{gru_model_forward.7} parent=0
    _
  %s6 = ssub.s32 1, %s4
  %s7 = scalar_select 0, %s6, %s4
  // Predicated region
  $region2: #{gru_model_forward.7} parent=0 // pred_check
    _
  $region3: #{gru_model_forward.7} parent=0 // pred_check_branch
    %9 = sbr.rel (0) target = $region5
  $region4: #{gru_model_forward.7} parent=0 // pred_region
    _
  $region5: #{gru_model_forward.7} parent=0 // pred_fallthru
    _
  // Predicated region
  $region6: #{gru_model_forward.7} parent=0 // pred_check
    _
  $region7: #{gru_model_forward.7} parent=0 // pred_check_branch
    %11 = sbr.rel (0) target = $region9
  $region8: #{gru_model_forward.7} parent=0 // pred_region
    _
  $region9: #{gru_model_forward.7} parent=0 // pred_fallthru
    _
  // Predicated region
  $region10: #{gru_model_forward.7} parent=0 // pred_check
    _
  $region11: #{gru_model_forward.7} parent=0 // pred_check_branch
    %13 = sbr.rel (0) target = $region13
  $region12: #{gru_model_forward.7} parent=0 // pred_region
    _
  $region13: #{gru_model_forward.7} parent=0 // pred_fallthru
    _
  %v14 = vld [vmem:[%s0] sm:$0xff]
  %v15 = vld [vmem:[%s0 + $0x8] sm:$0xff]
  %v16 = vld [vmem:[%s1] sm:$0xff]
  %v17 = vld [vmem:[%s1 + $0x8] sm:$0xff]
  %v18 = vld [vmem:[%s1 + $0x10] sm:$0xff]
  %v19 = vld [vmem:[%s1 + $0x18] sm:$0xff]
  %v20 = vld [vmem:[%s2] sm:$0x1]
  %v22 = vlaneseq
  %v23 = vshrl.u32 %v22, 7
  %v24 = vsub.s32 0, %v23
  %v25 = vrot.slane %v20, %v24
  %vm27 = vcmask 261120
  %v29 = vsel %vm27, %v14, 0
  %v32 = vsel %vm27, %v15, 0
  %34 = vmatprep.subr.mxu0 0.0
  %35 = vmatpush1.msra.mxu0 0.0
  %36 = vmatprep.subr.mxu0 0.0
  %37 = vmatpush1.msra.mxu0 0.0
  %38 = vmatprep.subr.mxu0 0.0
  %39 = vmatpush1.msra.mxu0 0.0
  %40 = vmatprep.subr.mxu0 0.0
  %41 = vmatpush1.msra.mxu0 0.0
  %42 = vmatprep.subr.mxu0 0.0
  %43 = vmatpush1.msra.mxu0 0.0
  %44 = vmatprep.subr.mxu0 0.0
  %45 = vmatpush1.msra.mxu0 0.0
  %46 = vmatprep.subr.mxu0 0.0
  %47 = vmatpush1.msra.mxu0 0.0
  %48 = vmatprep.subr.mxu0 0.0
  %49 = vmatpush1.msra.mxu0 0.0
  %50 = vmatprep.subr.mxu0 0.0
  %51 = vmatpush1.msra.mxu0 0.0
  %52 = vmatprep.subr.mxu0 0.0
  %53 = vmatpush1.msra.mxu0 0.0
  %54 = vmatprep.subr.mxu0 0.0
  %55 = vmatpush1.msra.mxu0 0.0
  %56 = vmatprep.subr.mxu0 0.0
  %57 = vmatpush1.msra.mxu0 0.0
  %58 = vmatprep.subr.mxu0 0.0
  %59 = vmatpush1.msra.mxu0 %v19
  %60 = vmatprep.subr.mxu0 0.0
  %61 = vmatpush1.msra.mxu0 %v18
  %62 = vmatprep.subr.mxu0 0.0
  %63 = vmatpush1.msra.mxu0 %v17
  %64 = vmatprep.subr.mxu0 0.0
  %65 = vmatpush1.msra.mxu0 %v16
  %66 = vmatprep.subr.mxu0 0.0
  %67 = vmatpush2.msra.mxu0 0.0
  %68 = vmatprep.subr.mxu0 0.0
  %69 = vmatpush2.msra.mxu0 0.0
  %70 = vmatprep.subr.mxu0 0.0
  %71 = vmatpush2.msra.mxu0 0.0
  %72 = vmatprep.subr.mxu0 0.0
  %73 = vmatpush2.msra.mxu0 0.0
  %74 = vmatprep.subr.mxu0 0.0
  %75 = vmatpush2.msra.mxu0 0.0
  %76 = vmatprep.subr.mxu0 0.0
  %77 = vmatpush2.msra.mxu0 0.0
  %78 = vmatprep.subr.mxu0 0.0
  %79 = vmatpush2.msra.mxu0 0.0
  %80 = vmatprep.subr.mxu0 0.0
  %81 = vmatpush2.msra.mxu0 0.0
  %82 = vmatprep.subr.mxu0 0.0
  %83 = vmatpush2.msra.mxu0 0.0
  %84 = vmatprep.subr.mxu0 0.0
  %85 = vmatpush2.msra.mxu0 0.0
  %86 = vmatprep.subr.mxu0 0.0
  %87 = vmatpush2.msra.mxu0 0.0
  %88 = vmatprep.subr.mxu0 0.0
  %89 = vmatpush2.msra.mxu0 0.0
  %90 = vmatprep.subr.mxu0 0.0
  %91 = vmatpush2.msra.mxu0 0.0
  %92 = vmatprep.subr.mxu0 0.0
  %93 = vmatpush2.msra.mxu0 0.0
  %94 = vmatprep.subr.mxu0 0.0
  %95 = vmatpush2.msra.mxu0 0.0
  %96 = vmatprep.subr.mxu0 0.0
  %97 = vmatpush2.msra.mxu0 0.0
  %98 = vmatprep.mubr.f32.mxu0 0.0
  %99 = vmatmul.mubr.f32.gmra.mxu0 %v29
  %v100 = vpop.f32.mrf.mxu0
  %v101 = vadd.f32 %v25, %v100
  %v102 = vpop.f32.mrf.mxu0
  %103 = vmatprep.mubr.f32.mxu0 0.0
  %104 = vmatmul.mubr.f32.gmra.mxu0 %v32
  %v105 = vpop.f32.mrf.mxu0
  %v106 = vadd.f32 %v25, %v105
  %v107 = vpop.f32.mrf.mxu0
  %108 = vdwg.mxu0
  %vm109 = vcmask 785408
  %110 = vst.msk [vmem:[%s3] sm:$0xff] %vm109, %v101
  %111 = vst.msk [vmem:[%s3 + $0x8] sm:$0xff] %vm109, %v106
  // Predicated region
  $region14: #{gru_model_forward.7} parent=0 // pred_check
    _
  $region15: #{gru_model_forward.7} parent=0 // pred_check_branch
    %113 = sbr.rel (0) target = $region17
  $region16: #{gru_model_forward.7} parent=0 // pred_region
    _
  $region17: #{gru_model_forward.7} parent=0 // pred_fallthru
    _
  // Predicated region
  $region18: #{gru_model_forward.7} parent=0 // pred_check
    _
  $region19: #{gru_model_forward.7} parent=0 // pred_check_branch
    %115 = sbr.rel (0) target = $region21
  $region20: #{gru_model_forward.7} parent=0 // pred_region
    _
  $region21: #{gru_model_forward.7} parent=0 // pred_fallthru
    _

// kernel: gru_model_forward.9
$region0: #{gru_model_forward.9}
  #allocation0 [shape = 'u32[]', space=smem, size = 0x4, offset = 0x4, fixed_abs, tag = 'smem constant byte address 0x4 - core index']
  #allocation1 [shape = 'u32[144,128]{1,0:T(1,128)}', space=vmem, size = 0x12000, scoped, tag = 'internal scratch']
  %s0 = inlined_call_operand.vmem [shape: f32[16,32], index: 0, kind: input, shape index: {}]
  %s1 = inlined_call_operand.vmem [shape: f32[32,8], index: 1, kind: input, shape index: {}]
  %s2 = inlined_call_operand.vmem [shape: f32[1,8], index: 2, kind: input, shape index: {}]
  %s3 = inlined_call_operand.vmem [shape: f32[16,8], index: 3, kind: output, shape index: {}]
  %s4 = sld [smem:[#allocation0]]
  $region22: #{gru_model_forward.9} parent=0
    _
  %s6 = ssub.s32 1, %s4
  %s7 = scalar_select 0, %s6, %s4
  // Predicated region
  $region2: #{gru_model_forward.9} parent=0 // pred_check
    _
  $region3: #{gru_model_forward.9} parent=0 // pred_check_branch
    %9 = sbr.rel (0) target = $region5
  $region4: #{gru_model_forward.9} parent=0 // pred_region
    _
  $region5: #{gru_model_forward.9} parent=0 // pred_fallthru
    _
  // Predicated region
  $region6: #{gru_model_forward.9} parent=0 // pred_check
    _
  $region7: #{gru_model_forward.9} parent=0 // pred_check_branch
    %11 = sbr.rel (0) target = $region9
  $region8: #{gru_model_forward.9} parent=0 // pred_region
    _
  $region9: #{gru_model_forward.9} parent=0 // pred_fallthru
    _
  // Predicated region
  $region10: #{gru_model_forward.9} parent=0 // pred_check
    _
  $region11: #{gru_model_forward.9} parent=0 // pred_check_branch
    %13 = sbr.rel (0) target = $region13
  $region12: #{gru_model_forward.9} parent=0 // pred_region
    _
  $region13: #{gru_model_forward.9} parent=0 // pred_fallthru
    _
  %v14 = vld [vmem:[%s0] sm:$0xff]
  %v15 = vld [vmem:[%s0 + $0x8] sm:$0xff]
  %v16 = vld [vmem:[%s1] sm:$0xff]
  %v17 = vld [vmem:[%s1 + $0x8] sm:$0xff]
  %v18 = vld [vmem:[%s1 + $0x10] sm:$0xff]
  %v19 = vld [vmem:[%s1 + $0x18] sm:$0xff]
  %v20 = vld [vmem:[%s2] sm:$0x1]
  %v22 = vlaneseq
  %v23 = vshrl.u32 %v22, 7
  %v24 = vsub.s32 0, %v23
  %v25 = vrot.slane %v20, %v24
  %vm27 = vcmask 261120
  %v29 = vsel %vm27, %v14, 0
  %v32 = vsel %vm27, %v15, 0
  %34 = vmatprep.subr.mxu0 0.0
  %35 = vmatpush1.msra.mxu0 0.0
  %36 = vmatprep.subr.mxu0 0.0
  %37 = vmatpush1.msra.mxu0 0.0
  %38 = vmatprep.subr.mxu0 0.0
  %39 = vmatpush1.msra.mxu0 0.0
  %40 = vmatprep.subr.mxu0 0.0
  %41 = vmatpush1.msra.mxu0 0.0
  %42 = vmatprep.subr.mxu0 0.0
  %43 = vmatpush1.msra.mxu0 0.0
  %44 = vmatprep.subr.mxu0 0.0
  %45 = vmatpush1.msra.mxu0 0.0
  %46 = vmatprep.subr.mxu0 0.0
  %47 = vmatpush1.msra.mxu0 0.0
  %48 = vmatprep.subr.mxu0 0.0
  %49 = vmatpush1.msra.mxu0 0.0
  %50 = vmatprep.subr.mxu0 0.0
  %51 = vmatpush1.msra.mxu0 0.0
  %52 = vmatprep.subr.mxu0 0.0
  %53 = vmatpush1.msra.mxu0 0.0
  %54 = vmatprep.subr.mxu0 0.0
  %55 = vmatpush1.msra.mxu0 0.0
  %56 = vmatprep.subr.mxu0 0.0
  %57 = vmatpush1.msra.mxu0 0.0
  %58 = vmatprep.subr.mxu0 0.0
  %59 = vmatpush1.msra.mxu0 %v19
  %60 = vmatprep.subr.mxu0 0.0
  %61 = vmatpush1.msra.mxu0 %v18
  %62 = vmatprep.subr.mxu0 0.0
  %63 = vmatpush1.msra.mxu0 %v17
  %64 = vmatprep.subr.mxu0 0.0
  %65 = vmatpush1.msra.mxu0 %v16
  %66 = vmatprep.subr.mxu0 0.0
  %67 = vmatpush2.msra.mxu0 0.0
  %68 = vmatprep.subr.mxu0 0.0
  %69 = vmatpush2.msra.mxu0 0.0
  %70 = vmatprep.subr.mxu0 0.0
  %71 = vmatpush2.msra.mxu0 0.0
  %72 = vmatprep.subr.mxu0 0.0
  %73 = vmatpush2.msra.mxu0 0.0
  %74 = vmatprep.subr.mxu0 0.0
  %75 = vmatpush2.msra.mxu0 0.0
  %76 = vmatprep.subr.mxu0 0.0
  %77 = vmatpush2.msra.mxu0 0.0
  %78 = vmatprep.subr.mxu0 0.0
  %79 = vmatpush2.msra.mxu0 0.0
  %80 = vmatprep.subr.mxu0 0.0
  %81 = vmatpush2.msra.mxu0 0.0
  %82 = vmatprep.subr.mxu0 0.0
  %83 = vmatpush2.msra.mxu0 0.0
  %84 = vmatprep.subr.mxu0 0.0
  %85 = vmatpush2.msra.mxu0 0.0
  %86 = vmatprep.subr.mxu0 0.0
  %87 = vmatpush2.msra.mxu0 0.0
  %88 = vmatprep.subr.mxu0 0.0
  %89 = vmatpush2.msra.mxu0 0.0
  %90 = vmatprep.subr.mxu0 0.0
  %91 = vmatpush2.msra.mxu0 0.0
  %92 = vmatprep.subr.mxu0 0.0
  %93 = vmatpush2.msra.mxu0 0.0
  %94 = vmatprep.subr.mxu0 0.0
  %95 = vmatpush2.msra.mxu0 0.0
  %96 = vmatprep.subr.mxu0 0.0
  %97 = vmatpush2.msra.mxu0 0.0
  %98 = vmatprep.mubr.f32.mxu0 0.0
  %99 = vmatmul.mubr.f32.gmra.mxu0 %v29
  %v100 = vpop.f32.mrf.mxu0
  %v101 = vadd.f32 %v25, %v100
  %v102 = vpop.f32.mrf.mxu0
  %103 = vmatprep.mubr.f32.mxu0 0.0
  %104 = vmatmul.mubr.f32.gmra.mxu0 %v32
  %v105 = vpop.f32.mrf.mxu0
  %v106 = vadd.f32 %v25, %v105
  %v107 = vpop.f32.mrf.mxu0
  %108 = vdwg.mxu0
  %vm109 = vcmask 64512
  %110 = vst.msk [vmem:[%s3] sm:$0xff] %vm109, %v101
  %111 = vst.msk [vmem:[%s3 + $0x8] sm:$0xff] %vm109, %v106
  // Predicated region
  $region14: #{gru_model_forward.9} parent=0 // pred_check
    _
  $region15: #{gru_model_forward.9} parent=0 // pred_check_branch
    %113 = sbr.rel (0) target = $region17
  $region16: #{gru_model_forward.9} parent=0 // pred_region
    _
  $region17: #{gru_model_forward.9} parent=0 // pred_fallthru
    _
  // Predicated region
  $region18: #{gru_model_forward.9} parent=0 // pred_check
    _
  $region19: #{gru_model_forward.9} parent=0 // pred_check_branch
    %115 = sbr.rel (0) target = $region21
  $region20: #{gru_model_forward.9} parent=0 // pred_region
    _
  $region21: #{gru_model_forward.9} parent=0 // pred_fallthru
    _

// kernel: gru_model_forward.6
$region0: #{gru_model_forward.6}
  #allocation0 [shape = 'u32[]', space=smem, size = 0x4, offset = 0x4, fixed_abs, tag = 'smem constant byte address 0x4 - core index']
  #allocation1 [shape = 'u32[144,128]{1,0:T(1,128)}', space=vmem, size = 0x12000, scoped, tag = 'internal scratch']
  #allocation2 [shape = 'f32[2,32]{1,0:T(2,128)}', space=vmem, size = 0x400, scoped, tag = 'scratch operand']
  %s0 = inlined_call_operand.vmem [shape: f32[8,2,96], index: 0, kind: input, shape index: {}]
  %s1 = inlined_call_operand.vmem [shape: f32[32,96], index: 1, kind: input, shape index: {}]
  %s2 = inlined_call_operand.vmem [shape: f32[1,32], index: 2, kind: input, shape index: {}]
  %s3 = inlined_call_operand.vmem [shape: f32[8,2,32], index: 3, kind: output, shape index: {}]
  %s4 = sld [smem:[#allocation0]]
  $region26: #{gru_model_forward.6} parent=0
    _
  %s6 = ssub.s32 1, %s4
  %s7 = scalar_select 0, %s6, %s4
  // Predicated region
  $region2: #{gru_model_forward.6} parent=0 // pred_check
    _
  $region3: #{gru_model_forward.6} parent=0 // pred_check_branch
    %9 = sbr.rel (0) target = $region5
  $region4: #{gru_model_forward.6} parent=0 // pred_region
    _
  $region5: #{gru_model_forward.6} parent=0 // pred_fallthru
    _
  // Predicated region
  $region6: #{gru_model_forward.6} parent=0 // pred_check
    _
  $region7: #{gru_model_forward.6} parent=0 // pred_check_branch
    %11 = sbr.rel (0) target = $region9
  $region8: #{gru_model_forward.6} parent=0 // pred_region
    _
  $region9: #{gru_model_forward.6} parent=0 // pred_fallthru
    _
  // Predicated region
  $region10: #{gru_model_forward.6} parent=0 // pred_check
    _
  $region11: #{gru_model_forward.6} parent=0 // pred_check_branch
    %13 = sbr.rel (0) target = $region13
  $region12: #{gru_model_forward.6} parent=0 // pred_region
    _
  $region13: #{gru_model_forward.6} parent=0 // pred_fallthru
    _
  %p14 = scmp.eq.s32.totalorder 0, 0
  // Predicated region
  $region14: #{gru_model_forward.6} parent=0 // pred_check
    %p15 = pneg %p14
  $region15: #{gru_model_forward.6} parent=0 // pred_check_branch
    %17 = sbr.rel (%p15) target = $region17
  $region16: #{gru_model_forward.6} parent=0 // pred_region
    %vm18 = vcmask 254976
    %19 = vst.msk [vmem:[#allocation2] sm:$0x3] %vm18, 0.0
  $region17: #{gru_model_forward.6} parent=0 // pred_fallthru
    _
  %v20 = vld [vmem:[%s1] sm:$0xff]
  %v21 = vld [vmem:[%s1 + $0x8] sm:$0xff]
  %v22 = vld [vmem:[%s1 + $0x10] sm:$0xff]
  %v23 = vld [vmem:[%s1 + $0x18] sm:$0xff]
  %v24 = vld [vmem:[%s2] sm:$0x1]
  %v25 = vld [vmem:[#allocation2] sm:$0x3]
  %v26 = vld [vmem:[%s0] sm:$0x3]
  %vm27 = vcmask 261120
  %v29 = vsel %vm27, %v25, 0
  %31 = vmatprep.subr.mxu0 0.0
  %32 = vmatpush1.msra.mxu0 0.0
  %33 = vmatprep.subr.mxu0 0.0
  %34 = vmatpush1.msra.mxu0 0.0
  %35 = vmatprep.subr.mxu0 0.0
  %36 = vmatpush1.msra.mxu0 0.0
  %37 = vmatprep.subr.mxu0 0.0
  %38 = vmatpush1.msra.mxu0 0.0
  %39 = vmatprep.subr.mxu0 0.0
  %40 = vmatpush1.msra.mxu0 0.0
  %41 = vmatprep.subr.mxu0 0.0
  %42 = vmatpush1.msra.mxu0 0.0
  %43 = vmatprep.subr.mxu0 0.0
  %44 = vmatpush1.msra.mxu0 0.0
  %45 = vmatprep.subr.mxu0 0.0
  %46 = vmatpush1.msra.mxu0 0.0
  %47 = vmatprep.subr.mxu0 0.0
  %48 = vmatpush1.msra.mxu0 0.0
  %49 = vmatprep.subr.mxu0 0.0
  %50 = vmatpush1.msra.mxu0 0.0
  %51 = vmatprep.subr.mxu0 0.0
  %52 = vmatpush1.msra.mxu0 0.0
  %53 = vmatprep.subr.mxu0 0.0
  %54 = vmatpush1.msra.mxu0 0.0
  %55 = vmatprep.subr.mxu0 0.0
  %56 = vmatpush1.msra.mxu0 %v23
  %57 = vmatprep.subr.mxu0 0.0
  %58 = vmatpush1.msra.mxu0 %v22
  %59 = vmatprep.subr.mxu0 0.0
  %60 = vmatpush1.msra.mxu0 %v21
  %61 = vmatprep.subr.mxu0 0.0
  %62 = vmatpush1.msra.mxu0 %v20
  %63 = vmatprep.subr.mxu0 0.0
  %64 = vmatpush2.msra.mxu0 0.0
  %65 = vmatprep.subr.mxu0 0.0
  %66 = vmatpush2.msra.mxu0 0.0
  %67 = vmatprep.subr.mxu0 0.0
  %68 = vmatpush2.msra.mxu0 0.0
  %69 = vmatprep.subr.mxu0 0.0
  %70 = vmatpush2.msra.mxu0 0.0
  %71 = vmatprep.subr.mxu0 0.0
  %72 = vmatpush2.msra.mxu0 0.0
  %73 = vmatprep.subr.mxu0 0.0
  %74 = vmatpush2.msra.mxu0 0.0
  %75 = vmatprep.subr.mxu0 0.0
  %76 = vmatpush2.msra.mxu0 0.0
  %77 = vmatprep.subr.mxu0 0.0
  %78 = vmatpush2.msra.mxu0 0.0
  %79 = vmatprep.subr.mxu0 0.0
  %80 = vmatpush2.msra.mxu0 0.0
  %81 = vmatprep.subr.mxu0 0.0
  %82 = vmatpush2.msra.mxu0 0.0
  %83 = vmatprep.subr.mxu0 0.0
  %84 = vmatpush2.msra.mxu0 0.0
  %85 = vmatprep.subr.mxu0 0.0
  %86 = vmatpush2.msra.mxu0 0.0
  %87 = vmatprep.subr.mxu0 0.0
  %88 = vmatpush2.msra.mxu0 0.0
  %89 = vmatprep.subr.mxu0 0.0
  %90 = vmatpush2.msra.mxu0 0.0
  %91 = vmatprep.subr.mxu0 0.0
  %92 = vmatpush2.msra.mxu0 0.0
  %93 = vmatprep.subr.mxu0 0.0
  %94 = vmatpush2.msra.mxu0 0.0
  %95 = vmatprep.mubr.f32.mxu0 0.0
  %96 = vmatmul.mubr.f32.gmra.mxu0 %v29
  %v97 = vpop.f32.mrf.mxu0
  %v98 = vadd.f32 0.0, %v97
  %v99 = vpop.f32.mrf.mxu0
  %100 = vdwg.mxu0
  %v101 = vadd.f32 %v26, %v98
  %v102 = vxor.u32 %v101, 2147483648
  %v103 = vmul.f32 %v102, 1.442695
  %v104 = vpow.pop %v103
  %v105 = vadd.f32 %v104, 1.0
  %v106 = vrcp.pop %v105
  %v107 = vmul.f32 1.0, %v106
  %v109 = vlaneseq
  %v110 = vshrl.u32 %v109, 7
  %v111 = vsub.s32 0, %v110
  %v112 = vrot.slane %v24, %v111
  %113 = vrot.lane.b32.xlu0 %v112, 64
  %v114 = vpop.permute.xlu0 %113
  %v116 = vadd.f32 %v98, %v114
  %118 = vrot.lane.b32.xlu0 %v116, 64
  %v119 = vpop.permute.xlu0 %118
  %v121 = vmul.f32 %v107, %v119
  %123 = vrot.lane.b32.xlu0 %v121, 64
  %v124 = vpop.permute.xlu0 %123
  %v126 = vadd.f32 %v26, %v124
  %v127 = vtanh.pop %v126
  %v128 = vsub.f32 1.0, %v107
  %130 = vrot.lane.b32.xlu0 %v127, 96
  %v131 = vpop.permute.xlu0 %130
  %v133 = vmul.f32 %v128, %v131
  %134 = vrot.lane.b32.xlu0 %v25, 32
  %v135 = vpop.permute.xlu0 %134
  %v137 = vmul.f32 %v107, %v135
  %v138 = vadd.f32 %v133, %v137
  %140 = vrot.lane.b32.xlu0 %v138, 96
  %v141 = vpop.permute.xlu0 %140
  %vm143 = vcmask 254976
  %144 = vst.msk [vmem:[%s3] sm:$0x3] %vm143, %v141
  %s145 = scalar_lea.vmem %s0, 2
  %v146 = vld [vmem:[%s145] sm:$0x3]
  %v147 = vsel %vm27, %v141, 0
  %149 = vmatprep.subr.mxu0 0.0
  %150 = vmatpush1.msra.mxu0 0.0
  %151 = vmatprep.subr.mxu0 0.0
  %152 = vmatpush1.msra.mxu0 0.0
  %153 = vmatprep.subr.mxu0 0.0
  %154 = vmatpush1.msra.mxu0 0.0
  %155 = vmatprep.subr.mxu0 0.0
  %156 = vmatpush1.msra.mxu0 0.0
  %157 = vmatprep.subr.mxu0 0.0
  %158 = vmatpush1.msra.mxu0 0.0
  %159 = vmatprep.subr.mxu0 0.0
  %160 = vmatpush1.msra.mxu0 0.0
  %161 = vmatprep.subr.mxu0 0.0
  %162 = vmatpush1.msra.mxu0 0.0
  %163 = vmatprep.subr.mxu0 0.0
  %164 = vmatpush1.msra.mxu0 0.0
  %165 = vmatprep.subr.mxu0 0.0
  %166 = vmatpush1.msra.mxu0 0.0
  %167 = vmatprep.subr.mxu0 0.0
  %168 = vmatpush1.msra.mxu0 0.0
  %169 = vmatprep.subr.mxu0 0.0
  %170 = vmatpush1.msra.mxu0 0.0
  %171 = vmatprep.subr.mxu0 0.0
  %172 = vmatpush1.msra.mxu0 0.0
  %173 = vmatprep.subr.mxu0 0.0
  %174 = vmatpush1.msra.mxu0 %v23
  %175 = vmatprep.subr.mxu0 0.0
  %176 = vmatpush1.msra.mxu0 %v22
  %177 = vmatprep.subr.mxu0 0.0
  %178 = vmatpush1.msra.mxu0 %v21
  %179 = vmatprep.subr.mxu0 0.0
  %180 = vmatpush1.msra.mxu0 %v20
  %181 = vmatprep.subr.mxu0 0.0
  %182 = vmatpush2.msra.mxu0 0.0
  %183 = vmatprep.subr.mxu0 0.0
  %184 = vmatpush2.msra.mxu0 0.0
  %185 = vmatprep.subr.mxu0 0.0
  %186 = vmatpush2.msra.mxu0 0.0
  %187 = vmatprep.subr.mxu0 0.0
  %188 = vmatpush2.msra.mxu0 0.0
  %189 = vmatprep.subr.mxu0 0.0
  %190 = vmatpush2.msra.mxu0 0.0
  %191 = vmatprep.subr.mxu0 0.0
  %192 = vmatpush2.msra.mxu0 0.0
  %193 = vmatprep.subr.mxu0 0.0
  %194 = vmatpush2.msra.mxu0 0.0
  %195 = vmatprep.subr.mxu0 0.0
  %196 = vmatpush2.msra.mxu0 0.0
  %197 = vmatprep.subr.mxu0 0.0
  %198 = vmatpush2.msra.mxu0 0.0
  %199 = vmatprep.subr.mxu0 0.0
  %200 = vmatpush2.msra.mxu0 0.0
  %201 = vmatprep.subr.mxu0 0.0
  %202 = vmatpush2.msra.mxu0 0.0
  %203 = vmatprep.subr.mxu0 0.0
  %204 = vmatpush2.msra.mxu0 0.0
  %205 = vmatprep.subr.mxu0 0.0
  %206 = vmatpush2.msra.mxu0 0.0
  %207 = vmatprep.subr.mxu0 0.0
  %208 = vmatpush2.msra.mxu0 0.0
  %209 = vmatprep.subr.mxu0 0.0
  %210 = vmatpush2.msra.mxu0 0.0
  %211 = vmatprep.subr.mxu0 0.0
  %212 = vmatpush2.msra.mxu0 0.0
  %213 = vmatprep.mubr.f32.mxu0 0.0
  %214 = vmatmul.mubr.f32.gmra.mxu0 %v147
  %v215 = vpop.f32.mrf.mxu0
  %v216 = vadd.f32 0.0, %v215
  %v217 = vpop.f32.mrf.mxu0
  %218 = vdwg.mxu0
  %v219 = vadd.f32 %v146, %v216
  %v220 = vxor.u32 %v219, 2147483648
  %v221 = vmul.f32 %v220, 1.442695
  %v222 = vpow.pop %v221
  %v223 = vadd.f32 %v222, 1.0
  %v224 = vrcp.pop %v223
  %v225 = vmul.f32 1.0, %v224
  %v226 = vadd.f32 %v216, %v114
  %228 = vrot.lane.b32.xlu0 %v226, 64
  %v229 = vpop.permute.xlu0 %228
  %v231 = vmul.f32 %v225, %v229
  %233 = vrot.lane.b32.xlu0 %v231, 64
  %v234 = vpop.permute.xlu0 %233
  %v236 = vadd.f32 %v146, %v234
  %v237 = vtanh.pop %v236
  %v238 = vsub.f32 1.0, %v225
  %240 = vrot.lane.b32.xlu0 %v237, 96
  %v241 = vpop.permute.xlu0 %240
  %v243 = vmul.f32 %v238, %v241
  %v244 = vmul.f32 %v225, %v138
  %v245 = vadd.f32 %v243, %v244
  %247 = vrot.lane.b32.xlu0 %v245, 96
  %v248 = vpop.permute.xlu0 %247
  %s250 = scalar_lea.vmem %s3, 2
  %251 = vst.msk [vmem:[%s250] sm:$0x3] %vm143, %v248
  %s252 = scalar_lea.vmem %s0, 4
  %v253 = vld [vmem:[%s252] sm:$0x3]
  %v254 = vsel %vm27, %v248, 0
  %256 = vmatprep.subr.mxu0 0.0
  %257 = vmatpush1.msra.mxu0 0.0
  %258 = vmatprep.subr.mxu0 0.0
  %259 = vmatpush1.msra.mxu0 0.0
  %260 = vmatprep.subr.mxu0 0.0
  %261 = vmatpush1.msra.mxu0 0.0
  %262 = vmatprep.subr.mxu0 0.0
  %263 = vmatpush1.msra.mxu0 0.0
  %264 = vmatprep.subr.mxu0 0.0
  %265 = vmatpush1.msra.mxu0 0.0
  %266 = vmatprep.subr.mxu0 0.0
  %267 = vmatpush1.msra.mxu0 0.0
  %268 = vmatprep.subr.mxu0 0.0
  %269 = vmatpush1.msra.mxu0 0.0
  %270 = vmatprep.subr.mxu0 0.0
  %271 = vmatpush1.msra.mxu0 0.0
  %272 = vmatprep.subr.mxu0 0.0
  %273 = vmatpush1.msra.mxu0 0.0
  %274 = vmatprep.subr.mxu0 0.0
  %275 = vmatpush1.msra.mxu0 0.0
  %276 = vmatprep.subr.mxu0 0.0
  %277 = vmatpush1.msra.mxu0 0.0
  %278 = vmatprep.subr.mxu0 0.0
  %279 = vmatpush1.msra.mxu0 0.0
  %280 = vmatprep.subr.mxu0 0.0
  %281 = vmatpush1.msra.mxu0 %v23
  %282 = vmatprep.subr.mxu0 0.0
  %283 = vmatpush1.msra.mxu0 %v22
  %284 = vmatprep.subr.mxu0 0.0
  %285 = vmatpush1.msra.mxu0 %v21
  %286 = vmatprep.subr.mxu0 0.0
  %287 = vmatpush1.msra.mxu0 %v20
  %288 = vmatprep.subr.mxu0 0.0
  %289 = vmatpush2.msra.mxu0 0.0
  %290 = vmatprep.subr.mxu0 0.0
  %291 = vmatpush2.msra.mxu0 0.0
  %292 = vmatprep.subr.mxu0 0.0
  %293 = vmatpush2.msra.mxu0 0.0
  %294 = vmatprep.subr.mxu0 0.0
  %295 = vmatpush2.msra.mxu0 0.0
  %296 = vmatprep.subr.mxu0 0.0
  %297 = vmatpush2.msra.mxu0 0.0
  %298 = vmatprep.subr.mxu0 0.0
  %299 = vmatpush2.msra.mxu0 0.0
  %300 = vmatprep.subr.mxu0 0.0
  %301 = vmatpush2.msra.mxu0 0.0
  %302 = vmatprep.subr.mxu0 0.0
  %303 = vmatpush2.msra.mxu0 0.0
  %304 = vmatprep.subr.mxu0 0.0
  %305 = vmatpush2.msra.mxu0 0.0
  %306 = vmatprep.subr.mxu0 0.0
  %307 = vmatpush2.msra.mxu0 0.0
  %308 = vmatprep.subr.mxu0 0.0
  %309 = vmatpush2.msra.mxu0 0.0
  %310 = vmatprep.subr.mxu0 0.0
  %311 = vmatpush2.msra.mxu0 0.0
  %312 = vmatprep.subr.mxu0 0.0
  %313 = vmatpush2.msra.mxu0 0.0
  %314 = vmatprep.subr.mxu0 0.0
  %315 = vmatpush2.msra.mxu0 0.0
  %316 = vmatprep.subr.mxu0 0.0
  %317 = vmatpush2.msra.mxu0 0.0
  %318 = vmatprep.subr.mxu0 0.0
  %319 = vmatpush2.msra.mxu0 0.0
  %320 = vmatprep.mubr.f32.mxu0 0.0
  %321 = vmatmul.mubr.f32.gmra.mxu0 %v254
  %v322 = vpop.f32.mrf.mxu0
  %v323 = vadd.f32 0.0, %v322
  %v324 = vpop.f32.mrf.mxu0
  %325 = vdwg.mxu0
  %v326 = vadd.f32 %v253, %v323
  %v327 = vxor.u32 %v326, 2147483648
  %v328 = vmul.f32 %v327, 1.442695
  %v329 = vpow.pop %v328
  %v330 = vadd.f32 %v329, 1.0
  %v331 = vrcp.pop %v330
  %v332 = vmul.f32 1.0, %v331
  %v333 = vadd.f32 %v323, %v114
  %335 = vrot.lane.b32.xlu0 %v333, 64
  %v336 = vpop.permute.xlu0 %335
  %v338 = vmul.f32 %v332, %v336
  %340 = vrot.lane.b32.xlu0 %v338, 64
  %v341 = vpop.permute.xlu0 %340
  %v343 = vadd.f32 %v253, %v341
  %v344 = vtanh.pop %v343
  %v345 = vsub.f32 1.0, %v332
  %347 = vrot.lane.b32.xlu0 %v344, 96
  %v348 = vpop.permute.xlu0 %347
  %v350 = vmul.f32 %v345, %v348
  %v351 = vmul.f32 %v332, %v245
  %v352 = vadd.f32 %v350, %v351
  %354 = vrot.lane.b32.xlu0 %v352, 96
  %v355 = vpop.permute.xlu0 %354
  %s357 = scalar_lea.vmem %s3, 4
  %358 = vst.msk [vmem:[%s357] sm:$0x3] %vm143, %v355
  %s359 = scalar_lea.vmem %s0, 6
  %v360 = vld [vmem:[%s359] sm:$0x3]
  %v361 = vsel %vm27, %v355, 0
  %363 = vmatprep.subr.mxu0 0.0
  %364 = vmatpush1.msra.mxu0 0.0
  %365 = vmatprep.subr.mxu0 0.0
  %366 = vmatpush1.msra.mxu0 0.0
  %367 = vmatprep.subr.mxu0 0.0
  %368 = vmatpush1.msra.mxu0 0.0
  %369 = vmatprep.subr.mxu0 0.0
  %370 = vmatpush1.msra.mxu0 0.0
  %371 = vmatprep.subr.mxu0 0.0
  %372 = vmatpush1.msra.mxu0 0.0
  %373 = vmatprep.subr.mxu0 0.0
  %374 = vmatpush1.msra.mxu0 0.0
  %375 = vmatprep.subr.mxu0 0.0
  %376 = vmatpush1.msra.mxu0 0.0
  %377 = vmatprep.subr.mxu0 0.0
  %378 = vmatpush1.msra.mxu0 0.0
  %379 = vmatprep.subr.mxu0 0.0
  %380 = vmatpush1.msra.mxu0 0.0
  %381 = vmatprep.subr.mxu0 0.0
  %382 = vmatpush1.msra.mxu0 0.0
  %383 = vmatprep.subr.mxu0 0.0
  %384 = vmatpush1.msra.mxu0 0.0
  %385 = vmatprep.subr.mxu0 0.0
  %386 = vmatpush1.msra.mxu0 0.0
  %387 = vmatprep.subr.mxu0 0.0
  %388 = vmatpush1.msra.mxu0 %v23
  %389 = vmatprep.subr.mxu0 0.0
  %390 = vmatpush1.msra.mxu0 %v22
  %391 = vmatprep.subr.mxu0 0.0
  %392 = vmatpush1.msra.mxu0 %v21
  %393 = vmatprep.subr.mxu0 0.0
  %394 = vmatpush1.msra.mxu0 %v20
  %395 = vmatprep.subr.mxu0 0.0
  %396 = vmatpush2.msra.mxu0 0.0
  %397 = vmatprep.subr.mxu0 0.0
  %398 = vmatpush2.msra.mxu0 0.0
  %399 = vmatprep.subr.mxu0 0.0
  %400 = vmatpush2.msra.mxu0 0.0
  %401 = vmatprep.subr.mxu0 0.0
  %402 = vmatpush2.msra.mxu0 0.0
  %403 = vmatprep.subr.mxu0 0.0
  %404 = vmatpush2.msra.mxu0 0.0
  %405 = vmatprep.subr.mxu0 0.0
  %406 = vmatpush2.msra.mxu0 0.0
  %407 = vmatprep.subr.mxu0 0.0
  %408 = vmatpush2.msra.mxu0 0.0
  %409 = vmatprep.subr.mxu0 0.0
  %410 = vmatpush2.msra.mxu0 0.0
  %411 = vmatprep.subr.mxu0 0.0
  %412 = vmatpush2.msra.mxu0 0.0
  %413 = vmatprep.subr.mxu0 0.0
  %414 = vmatpush2.msra.mxu0 0.0
  %415 = vmatprep.subr.mxu0 0.0
  %416 = vmatpush2.msra.mxu0 0.0
  %417 = vmatprep.subr.mxu0 0.0
  %418 = vmatpush2.msra.mxu0 0.0
  %419 = vmatprep.subr.mxu0 0.0
  %420 = vmatpush2.msra.mxu0 0.0
  %421 = vmatprep.subr.mxu0 0.0
  %422 = vmatpush2.msra.mxu0 0.0
  %423 = vmatprep.subr.mxu0 0.0
  %424 = vmatpush2.msra.mxu0 0.0
  %425 = vmatprep.subr.mxu0 0.0
  %426 = vmatpush2.msra.mxu0 0.0
  %427 = vmatprep.mubr.f32.mxu0 0.0
  %428 = vmatmul.mubr.f32.gmra.mxu0 %v361
  %v429 = vpop.f32.mrf.mxu0
  %v430 = vadd.f32 0.0, %v429
  %v431 = vpop.f32.mrf.mxu0
  %432 = vdwg.mxu0
  %v433 = vadd.f32 %v360, %v430
  %v434 = vxor.u32 %v433, 2147483648
  %v435 = vmul.f32 %v434, 1.442695
  %v436 = vpow.pop %v435
  %v437 = vadd.f32 %v436, 1.0
  %v438 = vrcp.pop %v437
  %v439 = vmul.f32 1.0, %v438
  %v440 = vadd.f32 %v430, %v114
  %442 = vrot.lane.b32.xlu0 %v440, 64
  %v443 = vpop.permute.xlu0 %442
  %v445 = vmul.f32 %v439, %v443
  %447 = vrot.lane.b32.xlu0 %v445, 64
  %v448 = vpop.permute.xlu0 %447
  %v450 = vadd.f32 %v360, %v448
  %v451 = vtanh.pop %v450
  %v452 = vsub.f32 1.0, %v439
  %454 = vrot.lane.b32.xlu0 %v451, 96
  %v455 = vpop.permute.xlu0 %454
  %v457 = vmul.f32 %v452, %v455
  %v458 = vmul.f32 %v439, %v352
  %v459 = vadd.f32 %v457, %v458
  %461 = vrot.lane.b32.xlu0 %v459, 96
  %v462 = vpop.permute.xlu0 %461
  %s464 = scalar_lea.vmem %s3, 6
  %465 = vst.msk [vmem:[%s464] sm:$0x3] %vm143, %v462
  %s466 = scalar_lea.vmem %s0, 8
  %v467 = vld [vmem:[%s466] sm:$0x3]
  %v468 = vsel %vm27, %v462, 0
  %470 = vmatprep.subr.mxu0 0.0
  %471 = vmatpush1.msra.mxu0 0.0
  %472 = vmatprep.subr.mxu0 0.0
  %473 = vmatpush1.msra.mxu0 0.0
  %474 = vmatprep.subr.mxu0 0.0
  %475 = vmatpush1.msra.mxu0 0.0
  %476 = vmatprep.subr.mxu0 0.0
  %477 = vmatpush1.msra.mxu0 0.0
  %478 = vmatprep.subr.mxu0 0.0
  %479 = vmatpush1.msra.mxu0 0.0
  %480 = vmatprep.subr.mxu0 0.0
  %481 = vmatpush1.msra.mxu0 0.0
  %482 = vmatprep.subr.mxu0 0.0
  %483 = vmatpush1.msra.mxu0 0.0
  %484 = vmatprep.subr.mxu0 0.0
  %485 = vmatpush1.msra.mxu0 0.0
  %486 = vmatprep.subr.mxu0 0.0
  %487 = vmatpush1.msra.mxu0 0.0
  %488 = vmatprep.subr.mxu0 0.0
  %489 = vmatpush1.msra.mxu0 0.0
  %490 = vmatprep.subr.mxu0 0.0
  %491 = vmatpush1.msra.mxu0 0.0
  %492 = vmatprep.subr.mxu0 0.0
  %493 = vmatpush1.msra.mxu0 0.0
  %494 = vmatprep.subr.mxu0 0.0
  %495 = vmatpush1.msra.mxu0 %v23
  %496 = vmatprep.subr.mxu0 0.0
  %497 = vmatpush1.msra.mxu0 %v22
  %498 = vmatprep.subr.mxu0 0.0
  %499 = vmatpush1.msra.mxu0 %v21
  %500 = vmatprep.subr.mxu0 0.0
  %501 = vmatpush1.msra.mxu0 %v20
  %502 = vmatprep.subr.mxu0 0.0
  %503 = vmatpush2.msra.mxu0 0.0
  %504 = vmatprep.subr.mxu0 0.0
  %505 = vmatpush2.msra.mxu0 0.0
  %506 = vmatprep.subr.mxu0 0.0
  %507 = vmatpush2.msra.mxu0 0.0
  %508 = vmatprep.subr.mxu0 0.0
  %509 = vmatpush2.msra.mxu0 0.0
  %510 = vmatprep.subr.mxu0 0.0
  %511 = vmatpush2.msra.mxu0 0.0
  %512 = vmatprep.subr.mxu0 0.0
  %513 = vmatpush2.msra.mxu0 0.0
  %514 = vmatprep.subr.mxu0 0.0
  %515 = vmatpush2.msra.mxu0 0.0
  %516 = vmatprep.subr.mxu0 0.0
  %517 = vmatpush2.msra.mxu0 0.0
  %518 = vmatprep.subr.mxu0 0.0
  %519 = vmatpush2.msra.mxu0 0.0
  %520 = vmatprep.subr.mxu0 0.0
  %521 = vmatpush2.msra.mxu0 0.0
  %522 = vmatprep.subr.mxu0 0.0
  %523 = vmatpush2.msra.mxu0 0.0
  %524 = vmatprep.subr.mxu0 0.0
  %525 = vmatpush2.msra.mxu0 0.0
  %526 = vmatprep.subr.mxu0 0.0
  %527 = vmatpush2.msra.mxu0 0.0
  %528 = vmatprep.subr.mxu0 0.0
  %529 = vmatpush2.msra.mxu0 0.0
  %530 = vmatprep.subr.mxu0 0.0
  %531 = vmatpush2.msra.mxu0 0.0
  %532 = vmatprep.subr.mxu0 0.0
  %533 = vmatpush2.msra.mxu0 0.0
  %534 = vmatprep.mubr.f32.mxu0 0.0
  %535 = vmatmul.mubr.f32.gmra.mxu0 %v468
  %v536 = vpop.f32.mrf.mxu0
  %v537 = vadd.f32 0.0, %v536
  %v538 = vpop.f32.mrf.mxu0
  %539 = vdwg.mxu0
  %v540 = vadd.f32 %v467, %v537
  %v541 = vxor.u32 %v540, 2147483648
  %v542 = vmul.f32 %v541, 1.442695
  %v543 = vpow.pop %v542
  %v544 = vadd.f32 %v543, 1.0
  %v545 = vrcp.pop %v544
  %v546 = vmul.f32 1.0, %v545
  %v547 = vadd.f32 %v537, %v114
  %549 = vrot.lane.b32.xlu0 %v547, 64
  %v550 = vpop.permute.xlu0 %549
  %v552 = vmul.f32 %v546, %v550
  %554 = vrot.lane.b32.xlu0 %v552, 64
  %v555 = vpop.permute.xlu0 %554
  %v557 = vadd.f32 %v467, %v555
  %v558 = vtanh.pop %v557
  %v559 = vsub.f32 1.0, %v546
  %561 = vrot.lane.b32.xlu0 %v558, 96
  %v562 = vpop.permute.xlu0 %561
  %v564 = vmul.f32 %v559, %v562
  %v565 = vmul.f32 %v546, %v459
  %v566 = vadd.f32 %v564, %v565
  %568 = vrot.lane.b32.xlu0 %v566, 96
  %v569 = vpop.permute.xlu0 %568
  %s571 = scalar_lea.vmem %s3, 8
  %572 = vst.msk [vmem:[%s571] sm:$0x3] %vm143, %v569
  %s573 = scalar_lea.vmem %s0, 10
  %v574 = vld [vmem:[%s573] sm:$0x3]
  %v575 = vsel %vm27, %v569, 0
  %577 = vmatprep.subr.mxu0 0.0
  %578 = vmatpush1.msra.mxu0 0.0
  %579 = vmatprep.subr.mxu0 0.0
  %580 = vmatpush1.msra.mxu0 0.0
  %581 = vmatprep.subr.mxu0 0.0
  %582 = vmatpush1.msra.mxu0 0.0
  %583 = vmatprep.subr.mxu0 0.0
  %584 = vmatpush1.msra.mxu0 0.0
  %585 = vmatprep.subr.mxu0 0.0
  %586 = vmatpush1.msra.mxu0 0.0
  %587 = vmatprep.subr.mxu0 0.0
  %588 = vmatpush1.msra.mxu0 0.0
  %589 = vmatprep.subr.mxu0 0.0
  %590 = vmatpush1.msra.mxu0 0.0
  %591 = vmatprep.subr.mxu0 0.0
  %592 = vmatpush1.msra.mxu0 0.0
  %593 = vmatprep.subr.mxu0 0.0
  %594 = vmatpush1.msra.mxu0 0.0
  %595 = vmatprep.subr.mxu0 0.0
  %596 = vmatpush1.msra.mxu0 0.0
  %597 = vmatprep.subr.mxu0 0.0
  %598 = vmatpush1.msra.mxu0 0.0
  %599 = vmatprep.subr.mxu0 0.0
  %600 = vmatpush1.msra.mxu0 0.0
  %601 = vmatprep.subr.mxu0 0.0
  %602 = vmatpush1.msra.mxu0 %v23
  %603 = vmatprep.subr.mxu0 0.0
  %604 = vmatpush1.msra.mxu0 %v22
  %605 = vmatprep.subr.mxu0 0.0
  %606 = vmatpush1.msra.mxu0 %v21
  %607 = vmatprep.subr.mxu0 0.0
  %608 = vmatpush1.msra.mxu0 %v20
  %609 = vmatprep.subr.mxu0 0.0
  %610 = vmatpush2.msra.mxu0 0.0
  %611 = vmatprep.subr.mxu0 0.0
  %612 = vmatpush2.msra.mxu0 0.0
  %613 = vmatprep.subr.mxu0 0.0
  %614 = vmatpush2.msra.mxu0 0.0
  %615 = vmatprep.subr.mxu0 0.0
  %616 = vmatpush2.msra.mxu0 0.0
  %617 = vmatprep.subr.mxu0 0.0
  %618 = vmatpush2.msra.mxu0 0.0
  %619 = vmatprep.subr.mxu0 0.0
  %620 = vmatpush2.msra.mxu0 0.0
  %621 = vmatprep.subr.mxu0 0.0
  %622 = vmatpush2.msra.mxu0 0.0
  %623 = vmatprep.subr.mxu0 0.0
  %624 = vmatpush2.msra.mxu0 0.0
  %625 = vmatprep.subr.mxu0 0.0
  %626 = vmatpush2.msra.mxu0 0.0
  %627 = vmatprep.subr.mxu0 0.0
  %628 = vmatpush2.msra.mxu0 0.0
  %629 = vmatprep.subr.mxu0 0.0
  %630 = vmatpush2.msra.mxu0 0.0
  %631 = vmatprep.subr.mxu0 0.0
  %632 = vmatpush2.msra.mxu0 0.0
  %633 = vmatprep.subr.mxu0 0.0
  %634 = vmatpush2.msra.mxu0 0.0
  %635 = vmatprep.subr.mxu0 0.0
  %636 = vmatpush2.msra.mxu0 0.0
  %637 = vmatprep.subr.mxu0 0.0
  %638 = vmatpush2.msra.mxu0 0.0
  %639 = vmatprep.subr.mxu0 0.0
  %640 = vmatpush2.msra.mxu0 0.0
  %641 = vmatprep.mubr.f32.mxu0 0.0
  %642 = vmatmul.mubr.f32.gmra.mxu0 %v575
  %v643 = vpop.f32.mrf.mxu0
  %v644 = vadd.f32 0.0, %v643
  %v645 = vpop.f32.mrf.mxu0
  %646 = vdwg.mxu0
  %v647 = vadd.f32 %v574, %v644
  %v648 = vxor.u32 %v647, 2147483648
  %v649 = vmul.f32 %v648, 1.442695
  %v650 = vpow.pop %v649
  %v651 = vadd.f32 %v650, 1.0
  %v652 = vrcp.pop %v651
  %v653 = vmul.f32 1.0, %v652
  %v654 = vadd.f32 %v644, %v114
  %656 = vrot.lane.b32.xlu0 %v654, 64
  %v657 = vpop.permute.xlu0 %656
  %v659 = vmul.f32 %v653, %v657
  %661 = vrot.lane.b32.xlu0 %v659, 64
  %v662 = vpop.permute.xlu0 %661
  %v664 = vadd.f32 %v574, %v662
  %v665 = vtanh.pop %v664
  %v666 = vsub.f32 1.0, %v653
  %668 = vrot.lane.b32.xlu0 %v665, 96
  %v669 = vpop.permute.xlu0 %668
  %v671 = vmul.f32 %v666, %v669
  %v672 = vmul.f32 %v653, %v566
  %v673 = vadd.f32 %v671, %v672
  %675 = vrot.lane.b32.xlu0 %v673, 96
  %v676 = vpop.permute.xlu0 %675
  %s678 = scalar_lea.vmem %s3, 10
  %679 = vst.msk [vmem:[%s678] sm:$0x3] %vm143, %v676
  %s680 = scalar_lea.vmem %s0, 12
  %v681 = vld [vmem:[%s680] sm:$0x3]
  %v682 = vsel %vm27, %v676, 0
  %684 = vmatprep.subr.mxu0 0.0
  %685 = vmatpush1.msra.mxu0 0.0
  %686 = vmatprep.subr.mxu0 0.0
  %687 = vmatpush1.msra.mxu0 0.0
  %688 = vmatprep.subr.mxu0 0.0
  %689 = vmatpush1.msra.mxu0 0.0
  %690 = vmatprep.subr.mxu0 0.0
  %691 = vmatpush1.msra.mxu0 0.0
  %692 = vmatprep.subr.mxu0 0.0
  %693 = vmatpush1.msra.mxu0 0.0
  %694 = vmatprep.subr.mxu0 0.0
  %695 = vmatpush1.msra.mxu0 0.0
  %696 = vmatprep.subr.mxu0 0.0
  %697 = vmatpush1.msra.mxu0 0.0
  %698 = vmatprep.subr.mxu0 0.0
  %699 = vmatpush1.msra.mxu0 0.0
  %700 = vmatprep.subr.mxu0 0.0
  %701 = vmatpush1.msra.mxu0 0.0
  %702 = vmatprep.subr.mxu0 0.0
  %703 = vmatpush1.msra.mxu0 0.0
  %704 = vmatprep.subr.mxu0 0.0
  %705 = vmatpush1.msra.mxu0 0.0
  %706 = vmatprep.subr.mxu0 0.0
  %707 = vmatpush1.msra.mxu0 0.0
  %708 = vmatprep.subr.mxu0 0.0
  %709 = vmatpush1.msra.mxu0 %v23
  %710 = vmatprep.subr.mxu0 0.0
  %711 = vmatpush1.msra.mxu0 %v22
  %712 = vmatprep.subr.mxu0 0.0
  %713 = vmatpush1.msra.mxu0 %v21
  %714 = vmatprep.subr.mxu0 0.0
  %715 = vmatpush1.msra.mxu0 %v20
  %716 = vmatprep.subr.mxu0 0.0
  %717 = vmatpush2.msra.mxu0 0.0
  %718 = vmatprep.subr.mxu0 0.0
  %719 = vmatpush2.msra.mxu0 0.0
  %720 = vmatprep.subr.mxu0 0.0
  %721 = vmatpush2.msra.mxu0 0.0
  %722 = vmatprep.subr.mxu0 0.0
  %723 = vmatpush2.msra.mxu0 0.0
  %724 = vmatprep.subr.mxu0 0.0
  %725 = vmatpush2.msra.mxu0 0.0
  %726 = vmatprep.subr.mxu0 0.0
  %727 = vmatpush2.msra.mxu0 0.0
  %728 = vmatprep.subr.mxu0 0.0
  %729 = vmatpush2.msra.mxu0 0.0
  %730 = vmatprep.subr.mxu0 0.0
  %731 = vmatpush2.msra.mxu0 0.0
  %732 = vmatprep.subr.mxu0 0.0
  %733 = vmatpush2.msra.mxu0 0.0
  %734 = vmatprep.subr.mxu0 0.0
  %735 = vmatpush2.msra.mxu0 0.0
  %736 = vmatprep.subr.mxu0 0.0
  %737 = vmatpush2.msra.mxu0 0.0
  %738 = vmatprep.subr.mxu0 0.0
  %739 = vmatpush2.msra.mxu0 0.0
  %740 = vmatprep.subr.mxu0 0.0
  %741 = vmatpush2.msra.mxu0 0.0
  %742 = vmatprep.subr.mxu0 0.0
  %743 = vmatpush2.msra.mxu0 0.0
  %744 = vmatprep.subr.mxu0 0.0
  %745 = vmatpush2.msra.mxu0 0.0
  %746 = vmatprep.subr.mxu0 0.0
  %747 = vmatpush2.msra.mxu0 0.0
  %748 = vmatprep.mubr.f32.mxu0 0.0
  %749 = vmatmul.mubr.f32.gmra.mxu0 %v682
  %v750 = vpop.f32.mrf.mxu0
  %v751 = vadd.f32 0.0, %v750
  %v752 = vpop.f32.mrf.mxu0
  %753 = vdwg.mxu0
  %v754 = vadd.f32 %v681, %v751
  %v755 = vxor.u32 %v754, 2147483648
  %v756 = vmul.f32 %v755, 1.442695
  %v757 = vpow.pop %v756
  %v758 = vadd.f32 %v757, 1.0
  %v759 = vrcp.pop %v758
  %v760 = vmul.f32 1.0, %v759
  %v761 = vadd.f32 %v751, %v114
  %763 = vrot.lane.b32.xlu0 %v761, 64
  %v764 = vpop.permute.xlu0 %763
  %v766 = vmul.f32 %v760, %v764
  %768 = vrot.lane.b32.xlu0 %v766, 64
  %v769 = vpop.permute.xlu0 %768
  %v771 = vadd.f32 %v681, %v769
  %v772 = vtanh.pop %v771
  %v773 = vsub.f32 1.0, %v760
  %775 = vrot.lane.b32.xlu0 %v772, 96
  %v776 = vpop.permute.xlu0 %775
  %v778 = vmul.f32 %v773, %v776
  %v779 = vmul.f32 %v760, %v673
  %v780 = vadd.f32 %v778, %v779
  %782 = vrot.lane.b32.xlu0 %v780, 96
  %v783 = vpop.permute.xlu0 %782
  %s785 = scalar_lea.vmem %s3, 12
  %786 = vst.msk [vmem:[%s785] sm:$0x3] %vm143, %v783
  %s787 = scalar_lea.vmem %s0, 14
  %v788 = vld [vmem:[%s787] sm:$0x3]
  %v789 = vsel %vm27, %v783, 0
  %791 = vmatprep.subr.mxu0 0.0
  %792 = vmatpush1.msra.mxu0 0.0
  %793 = vmatprep.subr.mxu0 0.0
  %794 = vmatpush1.msra.mxu0 0.0
  %795 = vmatprep.subr.mxu0 0.0
  %796 = vmatpush1.msra.mxu0 0.0
  %797 = vmatprep.subr.mxu0 0.0
  %798 = vmatpush1.msra.mxu0 0.0
  %799 = vmatprep.subr.mxu0 0.0
  %800 = vmatpush1.msra.mxu0 0.0
  %801 = vmatprep.subr.mxu0 0.0
  %802 = vmatpush1.msra.mxu0 0.0
  %803 = vmatprep.subr.mxu0 0.0
  %804 = vmatpush1.msra.mxu0 0.0
  %805 = vmatprep.subr.mxu0 0.0
  %806 = vmatpush1.msra.mxu0 0.0
  %807 = vmatprep.subr.mxu0 0.0
  %808 = vmatpush1.msra.mxu0 0.0
  %809 = vmatprep.subr.mxu0 0.0
  %810 = vmatpush1.msra.mxu0 0.0
  %811 = vmatprep.subr.mxu0 0.0
  %812 = vmatpush1.msra.mxu0 0.0
  %813 = vmatprep.subr.mxu0 0.0
  %814 = vmatpush1.msra.mxu0 0.0
  %815 = vmatprep.subr.mxu0 0.0
  %816 = vmatpush1.msra.mxu0 %v23
  %817 = vmatprep.subr.mxu0 0.0
  %818 = vmatpush1.msra.mxu0 %v22
  %819 = vmatprep.subr.mxu0 0.0
  %820 = vmatpush1.msra.mxu0 %v21
  %821 = vmatprep.subr.mxu0 0.0
  %822 = vmatpush1.msra.mxu0 %v20
  %823 = vmatprep.subr.mxu0 0.0
  %824 = vmatpush2.msra.mxu0 0.0
  %825 = vmatprep.subr.mxu0 0.0
  %826 = vmatpush2.msra.mxu0 0.0
  %827 = vmatprep.subr.mxu0 0.0
  %828 = vmatpush2.msra.mxu0 0.0
  %829 = vmatprep.subr.mxu0 0.0
  %830 = vmatpush2.msra.mxu0 0.0
  %831 = vmatprep.subr.mxu0 0.0
  %832 = vmatpush2.msra.mxu0 0.0
  %833 = vmatprep.subr.mxu0 0.0
  %834 = vmatpush2.msra.mxu0 0.0
  %835 = vmatprep.subr.mxu0 0.0
  %836 = vmatpush2.msra.mxu0 0.0
  %837 = vmatprep.subr.mxu0 0.0
  %838 = vmatpush2.msra.mxu0 0.0
  %839 = vmatprep.subr.mxu0 0.0
  %840 = vmatpush2.msra.mxu0 0.0
  %841 = vmatprep.subr.mxu0 0.0
  %842 = vmatpush2.msra.mxu0 0.0
  %843 = vmatprep.subr.mxu0 0.0
  %844 = vmatpush2.msra.mxu0 0.0
  %845 = vmatprep.subr.mxu0 0.0
  %846 = vmatpush2.msra.mxu0 0.0
  %847 = vmatprep.subr.mxu0 0.0
  %848 = vmatpush2.msra.mxu0 0.0
  %849 = vmatprep.subr.mxu0 0.0
  %850 = vmatpush2.msra.mxu0 0.0
  %851 = vmatprep.subr.mxu0 0.0
  %852 = vmatpush2.msra.mxu0 0.0
  %853 = vmatprep.subr.mxu0 0.0
  %854 = vmatpush2.msra.mxu0 0.0
  %855 = vmatprep.mubr.f32.mxu0 0.0
  %856 = vmatmul.mubr.f32.gmra.mxu0 %v789
  %v857 = vpop.f32.mrf.mxu0
  %v858 = vadd.f32 0.0, %v857
  %v859 = vpop.f32.mrf.mxu0
  %860 = vdwg.mxu0
  %v861 = vadd.f32 %v788, %v858
  %v862 = vxor.u32 %v861, 2147483648
  %v863 = vmul.f32 %v862, 1.442695
  %v864 = vpow.pop %v863
  %v865 = vadd.f32 %v864, 1.0
  %v866 = vrcp.pop %v865
  %v867 = vmul.f32 1.0, %v866
  %v868 = vadd.f32 %v858, %v114
  %870 = vrot.lane.b32.xlu0 %v868, 64
  %v871 = vpop.permute.xlu0 %870
  %v873 = vmul.f32 %v867, %v871
  %875 = vrot.lane.b32.xlu0 %v873, 64
  %v876 = vpop.permute.xlu0 %875
  %v878 = vadd.f32 %v788, %v876
  %v879 = vtanh.pop %v878
  %v880 = vsub.f32 1.0, %v867
  %882 = vrot.lane.b32.xlu0 %v879, 96
  %v883 = vpop.permute.xlu0 %882
  %v885 = vmul.f32 %v880, %v883
  %v886 = vmul.f32 %v867, %v780
  %v887 = vadd.f32 %v885, %v886
  %889 = vrot.lane.b32.xlu0 %v887, 96
  %v890 = vpop.permute.xlu0 %889
  %s892 = scalar_lea.vmem %s3, 14
  %893 = vst.msk [vmem:[%s892] sm:$0x3] %vm143, %v890
  %894 = vst.msk [vmem:[#allocation2] sm:$0x3] %vm143, %v890
  // Predicated region
  $region18: #{gru_model_forward.6} parent=0 // pred_check
    _
  $region19: #{gru_model_forward.6} parent=0 // pred_check_branch
    %896 = sbr.rel (0) target = $region21
  $region20: #{gru_model_forward.6} parent=0 // pred_region
    _
  $region21: #{gru_model_forward.6} parent=0 // pred_fallthru
    _
  // Predicated region
  $region22: #{gru_model_forward.6} parent=0 // pred_check
    _
  $region23: #{gru_model_forward.6} parent=0 // pred_check_branch
    %898 = sbr.rel (0) target = $region25
  $region24: #{gru_model_forward.6} parent=0 // pred_region
    _
  $region25: #{gru_model_forward.6} parent=0 // pred_fallthru
    _

</llo_original>
